<compile_context>
chip_gen: v7x
topology: tpu7x:2x2x1
jax: 0.10.0
libtpu: 0.0.40
codegen_flags: <defaults>
</compile_context>

<pallas_src>
import functools

import jax
import jax.numpy as jnp
from jax.experimental import pallas as pl
from jax.experimental.pallas import tpu as pltpu

LANE = 128  # pad feature dims and A's src/dst dims to the 128-lane axis


def _round_up(x, m):
    return (x + m - 1) // m * m


def _pad2(x, rows, cols):
    r, c = x.shape
    return jnp.pad(x, ((0, rows - r), (0, cols - c)))


# --------------------------------------------------------------------------
# One-time setup (hoisted out of the hot path per perf feedback):
# pad each layer's W_self/W_neigh to (Fp, Fp), stack as [W_self; W_neigh]
# -> (L, 2*Fp, Fp), pad biases -> (L, 1, Fp), cast once.
# --------------------------------------------------------------------------
def build_sage_params(params, compute_dtype=jnp.bfloat16, fp=LANE):
    w_stack, b_stack = [], []
    for (w_self, w_neigh, b) in params:
        ws = _pad2(w_self, fp, fp)
        wn = _pad2(w_neigh, fp, fp)
        w_stack.append(jnp.concatenate([ws, wn], axis=0))   # (2*fp, fp)
        b_stack.append(_pad2(b, 1, fp))                     # (1, fp)
    w_all = jnp.stack(w_stack).astype(compute_dtype)        # (L, 2*fp, fp)
    b_all = jnp.stack(b_stack).astype(jnp.float32)          # (L, 1, fp)
    return w_all, b_all


# --------------------------------------------------------------------------
# Fused 3-layer SAGE kernel (single resident block, everything stays on-chip).
# --------------------------------------------------------------------------
def _sage_fused_kernel(a_ref, x_ref, w_ref, b_ref, o_ref, z_ref,
                       *, num_layers, fp):
    """
    a_ref : (Np, Np)        bf16 row-normalized adjacency (lane/sublane dense)
    x_ref : (Np, Fp)        bf16 zero-padded input features
    w_ref : (L, 2*Fp, Fp)   bf16 stacked [W_self; W_neigh] per layer
    b_ref : (L, 1, Fp)      f32  zero-padded biases
    o_ref : (Np, Fp)        f32  padded output of the final layer
    z_ref : (Np, 2*Fp)      bf16 VMEM scratch for the fused [h | agg] operand
    """
    a = a_ref[...]
    h = x_ref[...]                                           # bf16 (Np, Fp)
    for l in range(num_layers):                              # static unroll
        # mean neighbor aggregation (MXU, f32 accumulate)
        agg = jnp.dot(a, h, preferred_element_type=jnp.float32)       # (Np, Fp)
        # fused self+neighbor transform without jnp.concatenate:
        # two lane-aligned stores into scratch, one K=2*Fp MXU pass.
        z_ref[:, :fp] = h.astype(z_ref.dtype)
        z_ref[:, fp:] = agg.astype(z_ref.dtype)
        out = jnp.dot(z_ref[...], w_ref[l],
                      preferred_element_type=jnp.float32) + b_ref[l]  # (Np, Fp)
        if l != num_layers - 1:
            h = jnp.maximum(out, 0.0).astype(x_ref.dtype)    # ReLU, back to bf16
        else:
            h = out                                          # keep f32
    o_ref[...] = h.astype(o_ref.dtype)


# --------------------------------------------------------------------------
# Jitted wrapper: pads A / X to lane-dense shapes, one pallas_call, slice out.
# --------------------------------------------------------------------------
@functools.partial(jax.jit, static_argnames=("out_size", "compute_dtype"))
def sage_forward(a, x, w_all, b_all, *, out_size, compute_dtype=jnp.bfloat16):
    n = a.shape[0]
    fp = w_all.shape[-1]
    num_layers = w_all.shape[0]
    n_pad = max(_round_up(n, LANE), LANE)                    # lane-dense A

    a_p = _pad2(a, n_pad, n_pad).astype(compute_dtype)       # (Np, Np)
    x_p = _pad2(x, n_pad, fp).astype(compute_dtype)          # (Np, Fp)

    kernel = functools.partial(_sage_fused_kernel, num_layers=num_layers, fp=fp)
    out_p = pl.pallas_call(
        kernel,
        out_shape=jax.ShapeDtypeStruct((n_pad, fp), jnp.float32),
        grid_spec=pltpu.PrefetchScalarGridSpec(
            num_scalar_prefetch=0,
            grid=(1,),
            in_specs=[
                pl.BlockSpec((n_pad, n_pad), lambda i: (0, 0)),               # A
                pl.BlockSpec((n_pad, fp), lambda i: (0, 0)),                  # X
                pl.BlockSpec((num_layers, 2 * fp, fp), lambda i: (0, 0, 0)),  # W
                pl.BlockSpec((num_layers, 1, fp), lambda i: (0, 0, 0)),       # b
            ],
            out_specs=pl.BlockSpec((n_pad, fp), lambda i: (0, 0)),
            scratch_shapes=[pltpu.VMEM((n_pad, 2 * fp), compute_dtype)],
        ),
        compiler_params=pltpu.CompilerParams(
            dimension_semantics=("arbitrary",),
            vmem_limit_bytes=64 * 1024 * 1024,
        ),
    )(a_p, x_p, w_all, b_all)
    return out_p[:n, :out_size]


def _init_params(key, in_size, hid_size, out_size):
    """Deterministic synthetic weights for the 3 SAGEConv layers."""
    sizes = [(in_size, hid_size), (hid_size, hid_size), (hid_size, out_size)]
    params = []
    for (fi, fo) in sizes:
        key, k1, k2, k3 = jax.random.split(key, 4)
        w_self = jax.random.normal(k1, (fi, fo), jnp.float32) * 0.1
        w_neigh = jax.random.normal(k2, (fi, fo), jnp.float32) * 0.1
        bias = jax.random.normal(k3, (1, fo), jnp.float32) * 0.01
        params.append((w_self, w_neigh, bias))
    return params


if __name__ == "__main__":
    key = jax.random.PRNGKey(0)
    N = 64            # number of nodes (dst == src, full-neighbor block)
    IN_SIZE = 32
    HID_SIZE = 32
    OUT_SIZE = 16

    k_feat, k_adj, k_par = jax.random.split(key, 3)

    # node features
    x = jax.random.normal(k_feat, (N, IN_SIZE), jnp.float32)

    # random graph -> dense row-normalized adjacency ('mean' aggregation)
    adj = (jax.random.uniform(k_adj, (N, N)) < 0.15).astype(jnp.float32)
    adj = adj + jnp.eye(N, dtype=jnp.float32)          # guarantee degree >= 1
    deg = jnp.sum(adj, axis=1, keepdims=True)
    a_mean = adj / deg                                  # (N_dst, N_src)

    params = _init_params(k_par, IN_SIZE, HID_SIZE, OUT_SIZE)

    # one-time parameter packing (hoisted out of the per-call path)
    w_all, b_all = build_sage_params(params)

    out = sage_forward(a_mean, x, w_all, b_all, out_size=OUT_SIZE)
    jax.block_until_ready(out)

    # pure-JAX f32 reference check (kernel runs in bf16 -> loosened tolerance)
    h_ref = x
    for l_id, (w_self, w_neigh, b) in enumerate(params):
        h_ref = h_ref @ w_self + (a_mean @ h_ref) @ w_neigh + b
        if l_id != len(params) - 1:
            h_ref = jnp.maximum(h_ref, 0.0)
    assert out.shape == (N, OUT_SIZE)
    max_err = float(jnp.max(jnp.abs(out - h_ref)))
    assert jnp.allclose(out, h_ref, atol=5e-2, rtol=5e-2), max_err

    print("KERNEL_OK")
</pallas_src>

<mosaic_0001>
module attributes {stable_mosaic.version = 11 : i64} {
  func.func @_sage_fused_kernel(%arg0: i32, %arg1: memref<128x128xbf16, #tpu.memory_space<vmem>>, %arg2: memref<128x128xbf16, #tpu.memory_space<vmem>>, %arg3: memref<3x256x128xbf16, #tpu.memory_space<vmem>>, %arg4: memref<3x1x128xf32, #tpu.memory_space<vmem>>, %arg5: memref<128x128xf32, #tpu.memory_space<vmem>>, %arg6: memref<128x256xbf16, #tpu.memory_space<vmem>>) attributes {dimension_semantics = [#tpu.dimension_semantics<arbitrary>], iteration_bounds = array<i64: 1>, scalar_prefetch = 0 : i64, scratch_operands = 1 : i64, tpu.core_type = #tpu.core_type<tc>, window_params = [{pipeline_mode = #tpu.pipeline_mode<synchronous>, transform_indices = @transform_0, window_bounds = array<i64: 128, 128>}, {pipeline_mode = #tpu.pipeline_mode<synchronous>, transform_indices = @transform_1, window_bounds = array<i64: 128, 128>}, {pipeline_mode = #tpu.pipeline_mode<synchronous>, transform_indices = @transform_2, window_bounds = array<i64: 3, 256, 128>}, {pipeline_mode = #tpu.pipeline_mode<synchronous>, transform_indices = @transform_3, window_bounds = array<i64: 3, 1, 128>}, {pipeline_mode = #tpu.pipeline_mode<synchronous>, transform_indices = @transform_4, window_bounds = array<i64: 128, 128>}]} {
    %c0 = arith.constant 0 : index
    %c0_0 = arith.constant 0 : index
    %0 = vector.load %arg1[%c0, %c0_0] : memref<128x128xbf16, #tpu.memory_space<vmem>>, vector<128x128xbf16>
    %c0_1 = arith.constant 0 : index
    %c0_2 = arith.constant 0 : index
    %1 = vector.load %arg2[%c0_1, %c0_2] : memref<128x128xbf16, #tpu.memory_space<vmem>>, vector<128x128xbf16>
    %cst = arith.constant dense<0.000000e+00> : vector<128x128xf32>
    %2 = tpu.matmul %0, %1, %cst {dimension_numbers = #tpu.dot_dimension_numbers<[1], [0], [0], [1], [0, 0, 1, 1], [], []>} : vector<128x128xbf16>, vector<128x128xbf16>, vector<128x128xf32> -> vector<128x128xf32>
    %c0_3 = arith.constant 0 : index
    %c0_4 = arith.constant 0 : index
    %3 = vector.load %arg6[%c0_3, %c0_4] : memref<128x256xbf16, #tpu.memory_space<vmem>>, vector<128x128xbf16>
    tpu.vector_store %arg6[%c0_3, %c0_4], %1 {strides = array<i32>} : memref<128x256xbf16, #tpu.memory_space<vmem>>, vector<128x128xbf16>,
    %4 = arith.truncf %2 : vector<128x128xf32> to vector<128x128xbf16>
    %c0_5 = arith.constant 0 : index
    %c128 = arith.constant 128 : index
    %5 = vector.load %arg6[%c0_5, %c128] : memref<128x256xbf16, #tpu.memory_space<vmem>>, vector<128x128xbf16>
    tpu.vector_store %arg6[%c0_5, %c128], %4 {strides = array<i32>} : memref<128x256xbf16, #tpu.memory_space<vmem>>, vector<128x128xbf16>,
    %c0_6 = arith.constant 0 : index
    %c0_7 = arith.constant 0 : index
    %6 = vector.load %arg6[%c0_6, %c0_7] : memref<128x256xbf16, #tpu.memory_space<vmem>>, vector<128x256xbf16>
    %c0_8 = arith.constant 0 : index
    %c0_9 = arith.constant 0 : index
    %c0_10 = arith.constant 0 : index
    %7 = vector.load %arg3[%c0_8, %c0_9, %c0_10] : memref<3x256x128xbf16, #tpu.memory_space<vmem>>, vector<1x256x128xbf16>
    %8 = vector.shape_cast %7 : vector<1x256x128xbf16> to vector<256x128xbf16>
    %cst_11 = arith.constant dense<0.000000e+00> : vector<128x128xf32>
    %9 = tpu.matmul %6, %8, %cst_11 {dimension_numbers = #tpu.dot_dimension_numbers<[1], [0], [0], [1], [0, 0, 1, 1], [], []>} : vector<128x256xbf16>, vector<256x128xbf16>, vector<128x128xf32> -> vector<128x128xf32>
    %c0_12 = arith.constant 0 : index
    %c0_13 = arith.constant 0 : index
    %c0_14 = arith.constant 0 : index
    %10 = vector.load %arg4[%c0_12, %c0_13, %c0_14] : memref<3x1x128xf32, #tpu.memory_space<vmem>>, vector<1x1x128xf32>
    %11 = vector.shape_cast %10 : vector<1x1x128xf32> to vector<1x128xf32>
    %12 = vector.broadcast %11 : vector<1x128xf32> to vector<128x128xf32>
    %13 = arith.addf %9, %12 : vector<128x128xf32>
    %cst_15 = arith.constant 0.000000e+00 : f32
    %14 = vector.broadcast %cst_15 : f32 to vector<128x128xf32>
    %15 = arith.maximumf %13, %14 : vector<128x128xf32>
    %16 = arith.truncf %15 : vector<128x128xf32> to vector<128x128xbf16>
    %cst_16 = arith.constant dense<0.000000e+00> : vector<128x128xf32>
    %17 = tpu.matmul %0, %16, %cst_16 {dimension_numbers = #tpu.dot_dimension_numbers<[1], [0], [0], [1], [0, 0, 1, 1], [], []>} : vector<128x128xbf16>, vector<128x128xbf16>, vector<128x128xf32> -> vector<128x128xf32>
    %c0_17 = arith.constant 0 : index
    %c0_18 = arith.constant 0 : index
    %18 = vector.load %arg6[%c0_17, %c0_18] : memref<128x256xbf16, #tpu.memory_space<vmem>>, vector<128x128xbf16>
    tpu.vector_store %arg6[%c0_17, %c0_18], %16 {strides = array<i32>} : memref<128x256xbf16, #tpu.memory_space<vmem>>, vector<128x128xbf16>,
    %19 = arith.truncf %17 : vector<128x128xf32> to vector<128x128xbf16>
    %c0_19 = arith.constant 0 : index
    %c128_20 = arith.constant 128 : index
    %20 = vector.load %arg6[%c0_19, %c128_20] : memref<128x256xbf16, #tpu.memory_space<vmem>>, vector<128x128xbf16>
    tpu.vector_store %arg6[%c0_19, %c128_20], %19 {strides = array<i32>} : memref<128x256xbf16, #tpu.memory_space<vmem>>, vector<128x128xbf16>,
    %c0_21 = arith.constant 0 : index
    %c0_22 = arith.constant 0 : index
    %21 = vector.load %arg6[%c0_21, %c0_22] : memref<128x256xbf16, #tpu.memory_space<vmem>>, vector<128x256xbf16>
    %c1 = arith.constant 1 : index
    %c0_23 = arith.constant 0 : index
    %c0_24 = arith.constant 0 : index
    %22 = vector.load %arg3[%c1, %c0_23, %c0_24] : memref<3x256x128xbf16, #tpu.memory_space<vmem>>, vector<1x256x128xbf16>
    %23 = vector.shape_cast %22 : vector<1x256x128xbf16> to vector<256x128xbf16>
    %cst_25 = arith.constant dense<0.000000e+00> : vector<128x128xf32>
    %24 = tpu.matmul %21, %23, %cst_25 {dimension_numbers = #tpu.dot_dimension_numbers<[1], [0], [0], [1], [0, 0, 1, 1], [], []>} : vector<128x256xbf16>, vector<256x128xbf16>, vector<128x128xf32> -> vector<128x128xf32>
    %c1_26 = arith.constant 1 : index
    %c0_27 = arith.constant 0 : index
    %c0_28 = arith.constant 0 : index
    %25 = vector.load %arg4[%c1_26, %c0_27, %c0_28] : memref<3x1x128xf32, #tpu.memory_space<vmem>>, vector<1x1x128xf32>
    %26 = vector.shape_cast %25 : vector<1x1x128xf32> to vector<1x128xf32>
    %27 = vector.broadcast %26 : vector<1x128xf32> to vector<128x128xf32>
    %28 = arith.addf %24, %27 : vector<128x128xf32>
    %cst_29 = arith.constant 0.000000e+00 : f32
    %29 = vector.broadcast %cst_29 : f32 to vector<128x128xf32>
    %30 = arith.maximumf %28, %29 : vector<128x128xf32>
    %31 = arith.truncf %30 : vector<128x128xf32> to vector<128x128xbf16>
    %cst_30 = arith.constant dense<0.000000e+00> : vector<128x128xf32>
    %32 = tpu.matmul %0, %31, %cst_30 {dimension_numbers = #tpu.dot_dimension_numbers<[1], [0], [0], [1], [0, 0, 1, 1], [], []>} : vector<128x128xbf16>, vector<128x128xbf16>, vector<128x128xf32> -> vector<128x128xf32>
    %c0_31 = arith.constant 0 : index
    %c0_32 = arith.constant 0 : index
    %33 = vector.load %arg6[%c0_31, %c0_32] : memref<128x256xbf16, #tpu.memory_space<vmem>>, vector<128x128xbf16>
    tpu.vector_store %arg6[%c0_31, %c0_32], %31 {strides = array<i32>} : memref<128x256xbf16, #tpu.memory_space<vmem>>, vector<128x128xbf16>,
    %34 = arith.truncf %32 : vector<128x128xf32> to vector<128x128xbf16>
    %c0_33 = arith.constant 0 : index
    %c128_34 = arith.constant 128 : index
    %35 = vector.load %arg6[%c0_33, %c128_34] : memref<128x256xbf16, #tpu.memory_space<vmem>>, vector<128x128xbf16>
    tpu.vector_store %arg6[%c0_33, %c128_34], %34 {strides = array<i32>} : memref<128x256xbf16, #tpu.memory_space<vmem>>, vector<128x128xbf16>,
    %c0_35 = arith.constant 0 : index
    %c0_36 = arith.constant 0 : index
    %36 = vector.load %arg6[%c0_35, %c0_36] : memref<128x256xbf16, #tpu.memory_space<vmem>>, vector<128x256xbf16>
    %c2 = arith.constant 2 : index
    %c0_37 = arith.constant 0 : index
    %c0_38 = arith.constant 0 : index
    %37 = vector.load %arg3[%c2, %c0_37, %c0_38] : memref<3x256x128xbf16, #tpu.memory_space<vmem>>, vector<1x256x128xbf16>
    %38 = vector.shape_cast %37 : vector<1x256x128xbf16> to vector<256x128xbf16>
    %cst_39 = arith.constant dense<0.000000e+00> : vector<128x128xf32>
    %39 = tpu.matmul %36, %38, %cst_39 {dimension_numbers = #tpu.dot_dimension_numbers<[1], [0], [0], [1], [0, 0, 1, 1], [], []>} : vector<128x256xbf16>, vector<256x128xbf16>, vector<128x128xf32> -> vector<128x128xf32>
    %c2_40 = arith.constant 2 : index
    %c0_41 = arith.constant 0 : index
    %c0_42 = arith.constant 0 : index
    %40 = vector.load %arg4[%c2_40, %c0_41, %c0_42] : memref<3x1x128xf32, #tpu.memory_space<vmem>>, vector<1x1x128xf32>
    %41 = vector.shape_cast %40 : vector<1x1x128xf32> to vector<1x128xf32>
    %42 = vector.broadcast %41 : vector<1x128xf32> to vector<128x128xf32>
    %43 = arith.addf %39, %42 : vector<128x128xf32>
    %c0_43 = arith.constant 0 : index
    %c0_44 = arith.constant 0 : index
    %44 = vector.load %arg5[%c0_43, %c0_44] : memref<128x128xf32, #tpu.memory_space<vmem>>, vector<128x128xf32>
    tpu.vector_store %arg5[%c0_43, %c0_44], %43 {strides = array<i32>} : memref<128x128xf32, #tpu.memory_space<vmem>>, vector<128x128xf32>,
    return
  }
  func.func @transform_0(%arg0: i32) -> (i32, i32) {
    %c0_i32 = arith.constant 0 : i32
    %c0_i32_0 = arith.constant 0 : i32
    %c0_i32_1 = arith.constant 0 : i32
    return %c0_i32, %c0_i32_0 : i32, i32
  }
  func.func @transform_1(%arg0: i32) -> (i32, i32) {
    %c0_i32 = arith.constant 0 : i32
    %c0_i32_0 = arith.constant 0 : i32
    %c0_i32_1 = arith.constant 0 : i32
    return %c0_i32, %c0_i32_0 : i32, i32
  }
  func.func @transform_2(%arg0: i32) -> (i32, i32, i32) {
    %c0_i32 = arith.constant 0 : i32
    %c0_i32_0 = arith.constant 0 : i32
    %c0_i32_1 = arith.constant 0 : i32
    %c0_i32_2 = arith.constant 0 : i32
    return %c0_i32, %c0_i32_0, %c0_i32_1 : i32, i32, i32
  }
  func.func @transform_3(%arg0: i32) -> (i32, i32, i32) {
    %c0_i32 = arith.constant 0 : i32
    %c0_i32_0 = arith.constant 0 : i32
    %c0_i32_1 = arith.constant 0 : i32
    %c0_i32_2 = arith.constant 0 : i32
    return %c0_i32, %c0_i32_0, %c0_i32_1 : i32, i32, i32
  }
  func.func @transform_4(%arg0: i32) -> (i32, i32) {
    %c0_i32 = arith.constant 0 : i32
    %c0_i32_0 = arith.constant 0 : i32
    %c0_i32_1 = arith.constant 0 : i32
    return %c0_i32, %c0_i32_0 : i32, i32
  }
}

</mosaic_0001>

<llo_original>
// kernel: sage_forward.1
$region0: #{sage_forward.1}
  #allocation0 [shape = 'u32[]', space=smem, size = 0x4, offset = 0x4, fixed_abs, tag = 'smem constant byte address 0x4 - core index']
  #allocation1 [shape = 'u32[144,128]{1,0:T(1,128)}', space=vmem, size = 0x12000, scoped, tag = 'internal scratch']
  #allocation2 [shape = 'bf16[128,256]{1,0:T(16,128)(2,1)}', space=vmem, size = 0x10000, scoped, tag = 'scratch operand']
  %s0 = inlined_call_operand.hbm [shape: bf16[128,128], index: 0, kind: input, shape index: {}]
  %s1 = inlined_call_operand.hbm [shape: bf16[128,128], index: 1, kind: input, shape index: {}]
  %s2 = inlined_call_operand.hbm [shape: bf16[3,256,128], index: 2, kind: input, shape index: {}]
  %s3 = inlined_call_operand.hbm [shape: f32[3,1,128], index: 3, kind: input, shape index: {}]
  %s4 = inlined_call_operand.hbm [shape: f32[128,128], index: 4, kind: output, shape index: {}]
  %s5 = sld [smem:[#allocation0]]
  $region42: #{sage_forward.1} parent=0
    _
  %s7 = ssub.s32 1, %s5
  %s8 = scalar_select 0, %s7, %s5
  $region1: #{sage_forward.1} parent=0
    #allocation3 [shape = 'u8[32768]{0}', space=vmem, size = 0x8000, scoped, tag = 'input window, operand 0, single buffered']
    #allocation4 [shape = 's32[1]{0}', space=sflag, size = 0x4, scoped, tag = 'scoped memory for sage_forward.1']
    #allocation5 [shape = 's32[1]{0}', space=sflag, size = 0x4, scoped, tag = 'scoped memory for sage_forward.1']
    #allocation6 [shape = 'u8[32768]{0}', space=vmem, size = 0x8000, scoped, tag = 'input window, operand 1, single buffered']
    #allocation7 [shape = 's32[1]{0}', space=sflag, size = 0x4, scoped, tag = 'scoped memory for sage_forward.1']
    #allocation8 [shape = 'u8[196608]{0}', space=vmem, size = 0x30000, scoped, tag = 'input window, operand 2, single buffered']
    #allocation9 [shape = 'u8[1536]{0}', space=vmem, size = 0x800, scoped, tag = 'input window, operand 3, single buffered']
    #allocation10 [shape = 's32[1]{0}', space=sflag, size = 0x4, scoped, tag = 'scoped memory for sage_forward.1']
    #allocation11 [shape = 'u8[65536]{0}', space=vmem, size = 0x10000, scoped, tag = 'output window, operand 0, single buffered']
    %9 = vsyncpa [#allocation4], 0
    %10 = vsyncpa [#allocation7], 0
    %11 = vsyncpa [#allocation10], 0
    %12 = vsyncpa [#allocation5], 0
    // Predicated region
    $region2: #{sage_forward.1} parent=1 // pred_check
      _
    $region3: #{sage_forward.1} parent=1 // pred_check_branch
      %14 = sbr.rel (0) target = $region5
    $region4: #{sage_forward.1} parent=1 // pred_region
      %s16 = ssub.s32 1024, 1024
      %17 = vsyncadd [#allocation4], %s16
      %s18 = sshll.u32 [#allocation3], 4
      %s19 = int_to_ptr.vmem [resolvable:$true] %s18
      %24 = dma.hbm_to_vmem [thread:$0]  %s0, 1024, %s19, [#allocation4], 64, 64, 4
    $region5: #{sage_forward.1} parent=1 // pred_fallthru
      _
    // Predicated region
    $region6: #{sage_forward.1} parent=1 // pred_check
      _
    $region7: #{sage_forward.1} parent=1 // pred_check_branch
      %26 = sbr.rel (0) target = $region9
    $region8: #{sage_forward.1} parent=1 // pred_region
      %s28 = ssub.s32 1024, 1024
      %29 = vsyncadd [#allocation7], %s28
      %s30 = sshll.u32 [#allocation6], 4
      %s31 = int_to_ptr.vmem [resolvable:$true] %s30
      %36 = dma.hbm_to_vmem [thread:$0]  %s1, 1024, %s31, [#allocation7], 64, 64, 4
    $region9: #{sage_forward.1} parent=1 // pred_fallthru
      _
    // Predicated region
    $region10: #{sage_forward.1} parent=1 // pred_check
      _
    $region11: #{sage_forward.1} parent=1 // pred_check_branch
      %38 = sbr.rel (0) target = $region13
    $region12: #{sage_forward.1} parent=1 // pred_region
      %s40 = ssub.s32 6144, 6144
      %41 = vsyncadd [#allocation7], %s40
      %s42 = sshll.u32 [#allocation8], 4
      %s43 = int_to_ptr.vmem [resolvable:$true] %s42
      %48 = dma.hbm_to_vmem [thread:$0]  %s2, 6144, %s43, [#allocation7], 64, 64, 4
    $region13: #{sage_forward.1} parent=1 // pred_fallthru
      _
    // Predicated region
    $region14: #{sage_forward.1} parent=1 // pred_check
      _
    $region15: #{sage_forward.1} parent=1 // pred_check_branch
      %50 = sbr.rel (0) target = $region17
    $region16: #{sage_forward.1} parent=1 // pred_region
      %s52 = ssub.s32 48, 48
      %53 = vsyncadd [#allocation10], %s52
      %s54 = sshll.u32 [#allocation9], 4
      %s55 = int_to_ptr.vmem [resolvable:$true] %s54
      %60 = dma.hbm_to_vmem [thread:$0]  %s3, 48, %s55, [#allocation10], 16, 16, 1
    $region17: #{sage_forward.1} parent=1 // pred_fallthru
      _
    // Predicated region
    $region18: #{sage_forward.1} parent=1 // pred_check
      _
    $region19: #{sage_forward.1} parent=1 // pred_check_branch
      %62 = sbr.rel (0) target = $region21
    $region20: #{sage_forward.1} parent=1 // pred_region
      %63 = dma.done [#allocation4], 1024
    $region21: #{sage_forward.1} parent=1 // pred_fallthru
      _
    // Predicated region
    $region22: #{sage_forward.1} parent=1 // pred_check
      _
    $region23: #{sage_forward.1} parent=1 // pred_check_branch
      %65 = sbr.rel (0) target = $region25
    $region24: #{sage_forward.1} parent=1 // pred_region
      %66 = dma.done [#allocation7], 1024
    $region25: #{sage_forward.1} parent=1 // pred_fallthru
      _
    // Predicated region
    $region26: #{sage_forward.1} parent=1 // pred_check
      _
    $region27: #{sage_forward.1} parent=1 // pred_check_branch
      %68 = sbr.rel (0) target = $region29
    $region28: #{sage_forward.1} parent=1 // pred_region
      %69 = dma.done [#allocation7], 6144
    $region29: #{sage_forward.1} parent=1 // pred_fallthru
      _
    // Predicated region
    $region30: #{sage_forward.1} parent=1 // pred_check
      _
    $region31: #{sage_forward.1} parent=1 // pred_check_branch
      %71 = sbr.rel (0) target = $region33
    $region32: #{sage_forward.1} parent=1 // pred_region
      %72 = dma.done [#allocation10], 48
    $region33: #{sage_forward.1} parent=1 // pred_fallthru
      _
    %v74 = vld [vmem:[#allocation3] sm:$0xf]
    %v75 = vld [vmem:[#allocation3 + $0x4] sm:$0xf]
    %v76 = vld [vmem:[#allocation3 + $0x8] sm:$0xf]
    %v77 = vld [vmem:[#allocation3 + $0xc] sm:$0xf]
    %v78 = vld [vmem:[#allocation3 + $0x10] sm:$0xf]
    %v79 = vld [vmem:[#allocation3 + $0x14] sm:$0xf]
    %v80 = vld [vmem:[#allocation3 + $0x18] sm:$0xf]
    %v81 = vld [vmem:[#allocation3 + $0x1c] sm:$0xf]
    %v82 = vld [vmem:[#allocation3 + $0x20] sm:$0xf]
    %v83 = vld [vmem:[#allocation3 + $0x24] sm:$0xf]
    %v84 = vld [vmem:[#allocation3 + $0x28] sm:$0xf]
    %v85 = vld [vmem:[#allocation3 + $0x2c] sm:$0xf]
    %v86 = vld [vmem:[#allocation3 + $0x30] sm:$0xf]
    %v87 = vld [vmem:[#allocation3 + $0x34] sm:$0xf]
    %v88 = vld [vmem:[#allocation3 + $0x38] sm:$0xf]
    %v89 = vld [vmem:[#allocation3 + $0x3c] sm:$0xf]
    %v90 = vld [vmem:[#allocation6] sm:$0xf]
    %v91 = vld [vmem:[#allocation6 + $0x4] sm:$0xf]
    %v92 = vld [vmem:[#allocation6 + $0x8] sm:$0xf]
    %v93 = vld [vmem:[#allocation6 + $0xc] sm:$0xf]
    %v94 = vld [vmem:[#allocation6 + $0x10] sm:$0xf]
    %v95 = vld [vmem:[#allocation6 + $0x14] sm:$0xf]
    %v96 = vld [vmem:[#allocation6 + $0x18] sm:$0xf]
    %v97 = vld [vmem:[#allocation6 + $0x1c] sm:$0xf]
    %v98 = vld [vmem:[#allocation6 + $0x20] sm:$0xf]
    %v99 = vld [vmem:[#allocation6 + $0x24] sm:$0xf]
    %v100 = vld [vmem:[#allocation6 + $0x28] sm:$0xf]
    %v101 = vld [vmem:[#allocation6 + $0x2c] sm:$0xf]
    %v102 = vld [vmem:[#allocation6 + $0x30] sm:$0xf]
    %v103 = vld [vmem:[#allocation6 + $0x34] sm:$0xf]
    %v104 = vld [vmem:[#allocation6 + $0x38] sm:$0xf]
    %v105 = vld [vmem:[#allocation6 + $0x3c] sm:$0xf]
    %v122 = vunpack.c.l.b16 %v74
    %v123 = vunpack.c.l.b16 %v75
    %v124 = vunpack.c.l.b16 %v76
    %v125 = vunpack.c.l.b16 %v77
    %v126 = vunpack.c.l.b16 %v78
    %v127 = vunpack.c.l.b16 %v79
    %v128 = vunpack.c.l.b16 %v80
    %v129 = vunpack.c.l.b16 %v81
    %v130 = vunpack.c.l.b16 %v82
    %v131 = vunpack.c.l.b16 %v83
    %v132 = vunpack.c.l.b16 %v84
    %v133 = vunpack.c.l.b16 %v85
    %v134 = vunpack.c.l.b16 %v86
    %v135 = vunpack.c.l.b16 %v87
    %v136 = vunpack.c.l.b16 %v88
    %v137 = vunpack.c.l.b16 %v89
    %v138 = vpack.c.b16 %v123, %v122
    %v139 = vpack.c.b16 %v125, %v124
    %v140 = vpack.c.b16 %v127, %v126
    %v141 = vpack.c.b16 %v129, %v128
    %v142 = vpack.c.b16 %v131, %v130
    %v143 = vpack.c.b16 %v133, %v132
    %v144 = vpack.c.b16 %v135, %v134
    %v145 = vpack.c.b16 %v137, %v136
    %v170 = vunpack.c.l.b16 %v90
    %v171 = vunpack.c.l.b16 %v91
    %v172 = vunpack.c.l.b16 %v92
    %v173 = vunpack.c.l.b16 %v93
    %v174 = vunpack.c.l.b16 %v94
    %v175 = vunpack.c.l.b16 %v95
    %v176 = vunpack.c.l.b16 %v96
    %v177 = vunpack.c.l.b16 %v97
    %v178 = vunpack.c.l.b16 %v98
    %v179 = vunpack.c.l.b16 %v99
    %v180 = vunpack.c.l.b16 %v100
    %v181 = vunpack.c.l.b16 %v101
    %v182 = vunpack.c.l.b16 %v102
    %v183 = vunpack.c.l.b16 %v103
    %v184 = vunpack.c.l.b16 %v104
    %v185 = vunpack.c.l.b16 %v105
    %v186 = vpack.c.b16 %v171, %v170
    %v187 = vpack.c.b16 %v173, %v172
    %v188 = vpack.c.b16 %v175, %v174
    %v189 = vpack.c.b16 %v177, %v176
    %v190 = vpack.c.b16 %v179, %v178
    %v191 = vpack.c.b16 %v181, %v180
    %v192 = vpack.c.b16 %v183, %v182
    %v193 = vpack.c.b16 %v185, %v184
    %202 = vmatprep.subr.bf16.mxu0 0
    %203 = vmatpush1.bf16.msra.mxu0 %v186
    %204 = vmatprep.subr.bf16.mxu0 0
    %205 = vmatpush1.bf16.msra.mxu0 %v187
    %206 = vmatprep.subr.bf16.mxu0 0
    %207 = vmatpush1.bf16.msra.mxu0 %v188
    %208 = vmatprep.subr.bf16.mxu0 0
    %209 = vmatpush1.bf16.msra.mxu0 %v189
    %210 = vmatprep.subr.bf16.mxu0 0
    %211 = vmatpush1.bf16.msra.mxu0 %v190
    %212 = vmatprep.subr.bf16.mxu0 0
    %213 = vmatpush1.bf16.msra.mxu0 %v191
    %214 = vmatprep.subr.bf16.mxu0 0
    %215 = vmatpush1.bf16.msra.mxu0 %v192
    %216 = vmatprep.subr.bf16.mxu0 0
    %217 = vmatpush1.bf16.msra.mxu0 %v193
    %218 = vmatprep.subr.bf16.mxu0 0
    %219 = vmatpush1.bf16.msra.mxu0 0
    %220 = vmatprep.subr.bf16.mxu0 0
    %221 = vmatpush1.bf16.msra.mxu0 0
    %222 = vmatprep.subr.bf16.mxu0 0
    %223 = vmatpush1.bf16.msra.mxu0 0
    %224 = vmatprep.subr.bf16.mxu0 0
    %225 = vmatpush1.bf16.msra.mxu0 0
    %226 = vmatprep.subr.bf16.mxu0 0
    %227 = vmatpush1.bf16.msra.mxu0 0
    %228 = vmatprep.subr.bf16.mxu0 0
    %229 = vmatpush1.bf16.msra.mxu0 0
    %230 = vmatprep.subr.bf16.mxu0 0
    %231 = vmatpush1.bf16.msra.mxu0 0
    %232 = vmatprep.subr.bf16.mxu0 0
    %233 = vmatpush1.bf16.msra.mxu0 0
    %234 = vmatprep.mubr.bf16.mxu0 0
    %235 = vmatmul.mubr.bf16.gmra.mrb[0].mxu0 %v138
    %v236 = vpop.f32.mrb[0].mxu0
    %v237 = vadd.f32 0.0, %v236
    %v238 = vpop.f32.mrb[0].mxu0
    %v239 = vpop.f32.mrb[0].mxu0
    %v240 = vadd.f32 0.0, %v239
    %v241 = vpop.f32.mrb[0].mxu0
    %242 = vmatprep.mubr.bf16.mxu0 0
    %243 = vmatmul.mubr.bf16.gmra.mrb[0].mxu0 %v139
    %v244 = vpop.f32.mrb[0].mxu0
    %v245 = vadd.f32 0.0, %v244
    %v246 = vpop.f32.mrb[0].mxu0
    %v247 = vpop.f32.mrb[0].mxu0
    %v248 = vadd.f32 0.0, %v247
    %v249 = vpop.f32.mrb[0].mxu0
    %250 = vmatprep.mubr.bf16.mxu0 0
    %251 = vmatmul.mubr.bf16.gmra.mrb[0].mxu0 %v140
    %v252 = vpop.f32.mrb[0].mxu0
    %v253 = vadd.f32 0.0, %v252
    %v254 = vpop.f32.mrb[0].mxu0
    %v255 = vpop.f32.mrb[0].mxu0
    %v256 = vadd.f32 0.0, %v255
    %v257 = vpop.f32.mrb[0].mxu0
    %258 = vmatprep.mubr.bf16.mxu0 0
    %259 = vmatmul.mubr.bf16.gmra.mrb[0].mxu0 %v141
    %v260 = vpop.f32.mrb[0].mxu0
    %v261 = vadd.f32 0.0, %v260
    %v262 = vpop.f32.mrb[0].mxu0
    %v263 = vpop.f32.mrb[0].mxu0
    %v264 = vadd.f32 0.0, %v263
    %v265 = vpop.f32.mrb[0].mxu0
    %266 = vmatprep.mubr.bf16.mxu0 0
    %267 = vmatmul.mubr.bf16.gmra.mrb[0].mxu0 %v142
    %v268 = vpop.f32.mrb[0].mxu0
    %v269 = vadd.f32 0.0, %v268
    %v270 = vpop.f32.mrb[0].mxu0
    %v271 = vpop.f32.mrb[0].mxu0
    %v272 = vadd.f32 0.0, %v271
    %v273 = vpop.f32.mrb[0].mxu0
    %274 = vmatprep.mubr.bf16.mxu0 0
    %275 = vmatmul.mubr.bf16.gmra.mrb[0].mxu0 %v143
    %v276 = vpop.f32.mrb[0].mxu0
    %v277 = vadd.f32 0.0, %v276
    %v278 = vpop.f32.mrb[0].mxu0
    %v279 = vpop.f32.mrb[0].mxu0
    %v280 = vadd.f32 0.0, %v279
    %v281 = vpop.f32.mrb[0].mxu0
    %282 = vmatprep.mubr.bf16.mxu0 0
    %283 = vmatmul.mubr.bf16.gmra.mrb[0].mxu0 %v144
    %v284 = vpop.f32.mrb[0].mxu0
    %v285 = vadd.f32 0.0, %v284
    %v286 = vpop.f32.mrb[0].mxu0
    %v287 = vpop.f32.mrb[0].mxu0
    %v288 = vadd.f32 0.0, %v287
    %v289 = vpop.f32.mrb[0].mxu0
    %290 = vmatprep.mubr.bf16.mxu0 0
    %291 = vmatmul.mubr.bf16.gmra.mrb[0].mxu0 %v145
    %v292 = vpop.f32.mrb[0].mxu0
    %v293 = vadd.f32 0.0, %v292
    %v294 = vpop.f32.mrb[0].mxu0
    %v295 = vpop.f32.mrb[0].mxu0
    %v296 = vadd.f32 0.0, %v295
    %v297 = vpop.f32.mrb[0].mxu0
    %298 = vdwg.mxu0
    %299 = vst [vmem:[#allocation2] sm:$0xff] %v186
    %300 = vst [vmem:[#allocation2 + $0x10] sm:$0xff] %v187
    %301 = vst [vmem:[#allocation2 + $0x20] sm:$0xff] %v188
    %302 = vst [vmem:[#allocation2 + $0x30] sm:$0xff] %v189
    %303 = vst [vmem:[#allocation2 + $0x40] sm:$0xff] %v190
    %304 = vst [vmem:[#allocation2 + $0x50] sm:$0xff] %v191
    %305 = vst [vmem:[#allocation2 + $0x60] sm:$0xff] %v192
    %306 = vst [vmem:[#allocation2 + $0x70] sm:$0xff] %v193
    %v307 = vpack.c.bf16 %v240, %v237
    %v308 = vpack.c.bf16 %v248, %v245
    %v309 = vpack.c.bf16 %v256, %v253
    %v310 = vpack.c.bf16 %v264, %v261
    %v311 = vpack.c.bf16 %v272, %v269
    %v312 = vpack.c.bf16 %v280, %v277
    %v313 = vpack.c.bf16 %v288, %v285
    %v314 = vpack.c.bf16 %v296, %v293
    %315 = vst [vmem:[#allocation2 + $0x8] sm:$0xff] %v307
    %316 = vst [vmem:[#allocation2 + $0x18] sm:$0xff] %v308
    %317 = vst [vmem:[#allocation2 + $0x28] sm:$0xff] %v309
    %318 = vst [vmem:[#allocation2 + $0x38] sm:$0xff] %v310
    %319 = vst [vmem:[#allocation2 + $0x48] sm:$0xff] %v311
    %320 = vst [vmem:[#allocation2 + $0x58] sm:$0xff] %v312
    %321 = vst [vmem:[#allocation2 + $0x68] sm:$0xff] %v313
    %322 = vst [vmem:[#allocation2 + $0x78] sm:$0xff] %v314
    %v323 = vld [vmem:[#allocation2] sm:$0xff]
    %v324 = vld [vmem:[#allocation2 + $0x8] sm:$0xff]
    %v325 = vld [vmem:[#allocation2 + $0x10] sm:$0xff]
    %v326 = vld [vmem:[#allocation2 + $0x18] sm:$0xff]
    %v327 = vld [vmem:[#allocation2 + $0x20] sm:$0xff]
    %v328 = vld [vmem:[#allocation2 + $0x28] sm:$0xff]
    %v329 = vld [vmem:[#allocation2 + $0x30] sm:$0xff]
    %v330 = vld [vmem:[#allocation2 + $0x38] sm:$0xff]
    %v331 = vld [vmem:[#allocation2 + $0x40] sm:$0xff]
    %v332 = vld [vmem:[#allocation2 + $0x48] sm:$0xff]
    %v333 = vld [vmem:[#allocation2 + $0x50] sm:$0xff]
    %v334 = vld [vmem:[#allocation2 + $0x58] sm:$0xff]
    %v335 = vld [vmem:[#allocation2 + $0x60] sm:$0xff]
    %v336 = vld [vmem:[#allocation2 + $0x68] sm:$0xff]
    %v337 = vld [vmem:[#allocation2 + $0x70] sm:$0xff]
    %v338 = vld [vmem:[#allocation2 + $0x78] sm:$0xff]
    %v339 = vld [vmem:[#allocation8] sm:$0xf]
    %v340 = vld [vmem:[#allocation8 + $0x4] sm:$0xf]
    %v341 = vld [vmem:[#allocation8 + $0x8] sm:$0xf]
    %v342 = vld [vmem:[#allocation8 + $0xc] sm:$0xf]
    %v343 = vld [vmem:[#allocation8 + $0x10] sm:$0xf]
    %v344 = vld [vmem:[#allocation8 + $0x14] sm:$0xf]
    %v345 = vld [vmem:[#allocation8 + $0x18] sm:$0xf]
    %v346 = vld [vmem:[#allocation8 + $0x1c] sm:$0xf]
    %v347 = vld [vmem:[#allocation8 + $0x20] sm:$0xf]
    %v348 = vld [vmem:[#allocation8 + $0x24] sm:$0xf]
    %v349 = vld [vmem:[#allocation8 + $0x28] sm:$0xf]
    %v350 = vld [vmem:[#allocation8 + $0x2c] sm:$0xf]
    %v351 = vld [vmem:[#allocation8 + $0x30] sm:$0xf]
    %v352 = vld [vmem:[#allocation8 + $0x34] sm:$0xf]
    %v353 = vld [vmem:[#allocation8 + $0x38] sm:$0xf]
    %v354 = vld [vmem:[#allocation8 + $0x3c] sm:$0xf]
    %v355 = vld [vmem:[#allocation8 + $0x40] sm:$0xf]
    %v356 = vld [vmem:[#allocation8 + $0x44] sm:$0xf]
    %v357 = vld [vmem:[#allocation8 + $0x48] sm:$0xf]
    %v358 = vld [vmem:[#allocation8 + $0x4c] sm:$0xf]
    %v359 = vld [vmem:[#allocation8 + $0x50] sm:$0xf]
    %v360 = vld [vmem:[#allocation8 + $0x54] sm:$0xf]
    %v361 = vld [vmem:[#allocation8 + $0x58] sm:$0xf]
    %v362 = vld [vmem:[#allocation8 + $0x5c] sm:$0xf]
    %v363 = vld [vmem:[#allocation8 + $0x60] sm:$0xf]
    %v364 = vld [vmem:[#allocation8 + $0x64] sm:$0xf]
    %v365 = vld [vmem:[#allocation8 + $0x68] sm:$0xf]
    %v366 = vld [vmem:[#allocation8 + $0x6c] sm:$0xf]
    %v367 = vld [vmem:[#allocation8 + $0x70] sm:$0xf]
    %v368 = vld [vmem:[#allocation8 + $0x74] sm:$0xf]
    %v369 = vld [vmem:[#allocation8 + $0x78] sm:$0xf]
    %v370 = vld [vmem:[#allocation8 + $0x7c] sm:$0xf]
    %v371 = vld [vmem:[#allocation9] sm:$0x1]
    %v373 = vlaneseq
    %v374 = vshrl.u32 %v373, 7
    %v375 = vsub.s32 0, %v374
    %v376 = vrot.slane %v371, %v375
    %v410 = vunpack.c.l.b16 %v339
    %v411 = vunpack.c.l.b16 %v340
    %v412 = vunpack.c.l.b16 %v341
    %v413 = vunpack.c.l.b16 %v342
    %v414 = vunpack.c.l.b16 %v343
    %v415 = vunpack.c.l.b16 %v344
    %v416 = vunpack.c.l.b16 %v345
    %v417 = vunpack.c.l.b16 %v346
    %v418 = vunpack.c.l.b16 %v347
    %v419 = vunpack.c.l.b16 %v348
    %v420 = vunpack.c.l.b16 %v349
    %v421 = vunpack.c.l.b16 %v350
    %v422 = vunpack.c.l.b16 %v351
    %v423 = vunpack.c.l.b16 %v352
    %v424 = vunpack.c.l.b16 %v353
    %v425 = vunpack.c.l.b16 %v354
    %v426 = vunpack.c.l.b16 %v355
    %v427 = vunpack.c.l.b16 %v356
    %v428 = vunpack.c.l.b16 %v357
    %v429 = vunpack.c.l.b16 %v358
    %v430 = vunpack.c.l.b16 %v359
    %v431 = vunpack.c.l.b16 %v360
    %v432 = vunpack.c.l.b16 %v361
    %v433 = vunpack.c.l.b16 %v362
    %v434 = vunpack.c.l.b16 %v363
    %v435 = vunpack.c.l.b16 %v364
    %v436 = vunpack.c.l.b16 %v365
    %v437 = vunpack.c.l.b16 %v366
    %v438 = vunpack.c.l.b16 %v367
    %v439 = vunpack.c.l.b16 %v368
    %v440 = vunpack.c.l.b16 %v369
    %v441 = vunpack.c.l.b16 %v370
    %v442 = vpack.c.b16 %v411, %v410
    %v443 = vpack.c.b16 %v413, %v412
    %v444 = vpack.c.b16 %v415, %v414
    %v445 = vpack.c.b16 %v417, %v416
    %v446 = vpack.c.b16 %v419, %v418
    %v447 = vpack.c.b16 %v421, %v420
    %v448 = vpack.c.b16 %v423, %v422
    %v449 = vpack.c.b16 %v425, %v424
    %v450 = vpack.c.b16 %v427, %v426
    %v451 = vpack.c.b16 %v429, %v428
    %v452 = vpack.c.b16 %v431, %v430
    %v453 = vpack.c.b16 %v433, %v432
    %v454 = vpack.c.b16 %v435, %v434
    %v455 = vpack.c.b16 %v437, %v436
    %v456 = vpack.c.b16 %v439, %v438
    %v457 = vpack.c.b16 %v441, %v440
    %474 = vmatprep.subr.bf16.mxu0 0
    %475 = vmatpush1.bf16.msra.mxu0 %v442
    %476 = vmatprep.subr.bf16.mxu0 0
    %477 = vmatpush1.bf16.msra.mxu0 %v443
    %478 = vmatprep.subr.bf16.mxu0 0
    %479 = vmatpush1.bf16.msra.mxu0 %v444
    %480 = vmatprep.subr.bf16.mxu0 0
    %481 = vmatpush1.bf16.msra.mxu0 %v445
    %482 = vmatprep.subr.bf16.mxu0 0
    %483 = vmatpush1.bf16.msra.mxu0 %v446
    %484 = vmatprep.subr.bf16.mxu0 0
    %485 = vmatpush1.bf16.msra.mxu0 %v447
    %486 = vmatprep.subr.bf16.mxu0 0
    %487 = vmatpush1.bf16.msra.mxu0 %v448
    %488 = vmatprep.subr.bf16.mxu0 0
    %489 = vmatpush1.bf16.msra.mxu0 %v449
    %490 = vmatprep.subr.bf16.mxu0 0
    %491 = vmatpush1.bf16.msra.mxu0 %v450
    %492 = vmatprep.subr.bf16.mxu0 0
    %493 = vmatpush1.bf16.msra.mxu0 %v451
    %494 = vmatprep.subr.bf16.mxu0 0
    %495 = vmatpush1.bf16.msra.mxu0 %v452
    %496 = vmatprep.subr.bf16.mxu0 0
    %497 = vmatpush1.bf16.msra.mxu0 %v453
    %498 = vmatprep.subr.bf16.mxu0 0
    %499 = vmatpush1.bf16.msra.mxu0 %v454
    %500 = vmatprep.subr.bf16.mxu0 0
    %501 = vmatpush1.bf16.msra.mxu0 %v455
    %502 = vmatprep.subr.bf16.mxu0 0
    %503 = vmatpush1.bf16.msra.mxu0 %v456
    %504 = vmatprep.subr.bf16.mxu0 0
    %505 = vmatpush1.bf16.msra.mxu0 %v457
    %506 = vmatprep.mubr.bf16.mxu0 %v324
    %507 = vmatmul.mubr.bf16.gmra.mrb[0].mxu0 %v323
    %v508 = vpop.f32.mrb[0].mxu0
    %v509 = vadd.f32 %v376, %v508
    %v510 = vpop.f32.mrb[0].mxu0
    %v511 = vpop.f32.mrb[0].mxu0
    %v512 = vadd.f32 %v376, %v511
    %v513 = vpop.f32.mrb[0].mxu0
    %514 = vmatprep.mubr.bf16.mxu0 %v326
    %515 = vmatmul.mubr.bf16.gmra.mrb[0].mxu0 %v325
    %v516 = vpop.f32.mrb[0].mxu0
    %v517 = vadd.f32 %v376, %v516
    %v518 = vpop.f32.mrb[0].mxu0
    %v519 = vpop.f32.mrb[0].mxu0
    %v520 = vadd.f32 %v376, %v519
    %v521 = vpop.f32.mrb[0].mxu0
    %522 = vmatprep.mubr.bf16.mxu0 %v328
    %523 = vmatmul.mubr.bf16.gmra.mrb[0].mxu0 %v327
    %v524 = vpop.f32.mrb[0].mxu0
    %v525 = vadd.f32 %v376, %v524
    %v526 = vpop.f32.mrb[0].mxu0
    %v527 = vpop.f32.mrb[0].mxu0
    %v528 = vadd.f32 %v376, %v527
    %v529 = vpop.f32.mrb[0].mxu0
    %530 = vmatprep.mubr.bf16.mxu0 %v330
    %531 = vmatmul.mubr.bf16.gmra.mrb[0].mxu0 %v329
    %v532 = vpop.f32.mrb[0].mxu0
    %v533 = vadd.f32 %v376, %v532
    %v534 = vpop.f32.mrb[0].mxu0
    %v535 = vpop.f32.mrb[0].mxu0
    %v536 = vadd.f32 %v376, %v535
    %v537 = vpop.f32.mrb[0].mxu0
    %538 = vmatprep.mubr.bf16.mxu0 %v332
    %539 = vmatmul.mubr.bf16.gmra.mrb[0].mxu0 %v331
    %v540 = vpop.f32.mrb[0].mxu0
    %v541 = vadd.f32 %v376, %v540
    %v542 = vpop.f32.mrb[0].mxu0
    %v543 = vpop.f32.mrb[0].mxu0
    %v544 = vadd.f32 %v376, %v543
    %v545 = vpop.f32.mrb[0].mxu0
    %546 = vmatprep.mubr.bf16.mxu0 %v334
    %547 = vmatmul.mubr.bf16.gmra.mrb[0].mxu0 %v333
    %v548 = vpop.f32.mrb[0].mxu0
    %v549 = vadd.f32 %v376, %v548
    %v550 = vpop.f32.mrb[0].mxu0
    %v551 = vpop.f32.mrb[0].mxu0
    %v552 = vadd.f32 %v376, %v551
    %v553 = vpop.f32.mrb[0].mxu0
    %554 = vmatprep.mubr.bf16.mxu0 %v336
    %555 = vmatmul.mubr.bf16.gmra.mrb[0].mxu0 %v335
    %v556 = vpop.f32.mrb[0].mxu0
    %v557 = vadd.f32 %v376, %v556
    %v558 = vpop.f32.mrb[0].mxu0
    %v559 = vpop.f32.mrb[0].mxu0
    %v560 = vadd.f32 %v376, %v559
    %v561 = vpop.f32.mrb[0].mxu0
    %562 = vmatprep.mubr.bf16.mxu0 %v338
    %563 = vmatmul.mubr.bf16.gmra.mrb[0].mxu0 %v337
    %v564 = vpop.f32.mrb[0].mxu0
    %v565 = vadd.f32 %v376, %v564
    %v566 = vpop.f32.mrb[0].mxu0
    %v567 = vpop.f32.mrb[0].mxu0
    %v568 = vadd.f32 %v376, %v567
    %v569 = vpop.f32.mrb[0].mxu0
    %570 = vdwg.mxu0
    %v571 = vmax.f32 %v509, 0.0
    %v572 = vmax.f32 %v512, 0.0
    %v573 = vmax.f32 %v517, 0.0
    %v574 = vmax.f32 %v520, 0.0
    %v575 = vmax.f32 %v525, 0.0
    %v576 = vmax.f32 %v528, 0.0
    %v577 = vmax.f32 %v533, 0.0
    %v578 = vmax.f32 %v536, 0.0
    %v579 = vmax.f32 %v541, 0.0
    %v580 = vmax.f32 %v544, 0.0
    %v581 = vmax.f32 %v549, 0.0
    %v582 = vmax.f32 %v552, 0.0
    %v583 = vmax.f32 %v557, 0.0
    %v584 = vmax.f32 %v560, 0.0
    %v585 = vmax.f32 %v565, 0.0
    %v586 = vmax.f32 %v568, 0.0
    %v587 = vpack.c.bf16 %v572, %v571
    %v588 = vpack.c.bf16 %v574, %v573
    %v589 = vpack.c.bf16 %v576, %v575
    %v590 = vpack.c.bf16 %v578, %v577
    %v591 = vpack.c.bf16 %v580, %v579
    %v592 = vpack.c.bf16 %v582, %v581
    %v593 = vpack.c.bf16 %v584, %v583
    %v594 = vpack.c.bf16 %v586, %v585
    %595 = vmatprep.subr.bf16.mxu0 0
    %596 = vmatpush1.bf16.msra.mxu0 %v587
    %597 = vmatprep.subr.bf16.mxu0 0
    %598 = vmatpush1.bf16.msra.mxu0 %v588
    %599 = vmatprep.subr.bf16.mxu0 0
    %600 = vmatpush1.bf16.msra.mxu0 %v589
    %601 = vmatprep.subr.bf16.mxu0 0
    %602 = vmatpush1.bf16.msra.mxu0 %v590
    %603 = vmatprep.subr.bf16.mxu0 0
    %604 = vmatpush1.bf16.msra.mxu0 %v591
    %605 = vmatprep.subr.bf16.mxu0 0
    %606 = vmatpush1.bf16.msra.mxu0 %v592
    %607 = vmatprep.subr.bf16.mxu0 0
    %608 = vmatpush1.bf16.msra.mxu0 %v593
    %609 = vmatprep.subr.bf16.mxu0 0
    %610 = vmatpush1.bf16.msra.mxu0 %v594
    %611 = vmatprep.subr.bf16.mxu0 0
    %612 = vmatpush1.bf16.msra.mxu0 0
    %613 = vmatprep.subr.bf16.mxu0 0
    %614 = vmatpush1.bf16.msra.mxu0 0
    %615 = vmatprep.subr.bf16.mxu0 0
    %616 = vmatpush1.bf16.msra.mxu0 0
    %617 = vmatprep.subr.bf16.mxu0 0
    %618 = vmatpush1.bf16.msra.mxu0 0
    %619 = vmatprep.subr.bf16.mxu0 0
    %620 = vmatpush1.bf16.msra.mxu0 0
    %621 = vmatprep.subr.bf16.mxu0 0
    %622 = vmatpush1.bf16.msra.mxu0 0
    %623 = vmatprep.subr.bf16.mxu0 0
    %624 = vmatpush1.bf16.msra.mxu0 0
    %625 = vmatprep.subr.bf16.mxu0 0
    %626 = vmatpush1.bf16.msra.mxu0 0
    %627 = vmatprep.mubr.bf16.mxu0 0
    %628 = vmatmul.mubr.bf16.gmra.mrb[0].mxu0 %v138
    %v629 = vpop.f32.mrb[0].mxu0
    %v630 = vadd.f32 0.0, %v629
    %v631 = vpop.f32.mrb[0].mxu0
    %v632 = vpop.f32.mrb[0].mxu0
    %v633 = vadd.f32 0.0, %v632
    %v634 = vpop.f32.mrb[0].mxu0
    %635 = vmatprep.mubr.bf16.mxu0 0
    %636 = vmatmul.mubr.bf16.gmra.mrb[0].mxu0 %v139
    %v637 = vpop.f32.mrb[0].mxu0
    %v638 = vadd.f32 0.0, %v637
    %v639 = vpop.f32.mrb[0].mxu0
    %v640 = vpop.f32.mrb[0].mxu0
    %v641 = vadd.f32 0.0, %v640
    %v642 = vpop.f32.mrb[0].mxu0
    %643 = vmatprep.mubr.bf16.mxu0 0
    %644 = vmatmul.mubr.bf16.gmra.mrb[0].mxu0 %v140
    %v645 = vpop.f32.mrb[0].mxu0
    %v646 = vadd.f32 0.0, %v645
    %v647 = vpop.f32.mrb[0].mxu0
    %v648 = vpop.f32.mrb[0].mxu0
    %v649 = vadd.f32 0.0, %v648
    %v650 = vpop.f32.mrb[0].mxu0
    %651 = vmatprep.mubr.bf16.mxu0 0
    %652 = vmatmul.mubr.bf16.gmra.mrb[0].mxu0 %v141
    %v653 = vpop.f32.mrb[0].mxu0
    %v654 = vadd.f32 0.0, %v653
    %v655 = vpop.f32.mrb[0].mxu0
    %v656 = vpop.f32.mrb[0].mxu0
    %v657 = vadd.f32 0.0, %v656
    %v658 = vpop.f32.mrb[0].mxu0
    %659 = vmatprep.mubr.bf16.mxu0 0
    %660 = vmatmul.mubr.bf16.gmra.mrb[0].mxu0 %v142
    %v661 = vpop.f32.mrb[0].mxu0
    %v662 = vadd.f32 0.0, %v661
    %v663 = vpop.f32.mrb[0].mxu0
    %v664 = vpop.f32.mrb[0].mxu0
    %v665 = vadd.f32 0.0, %v664
    %v666 = vpop.f32.mrb[0].mxu0
    %667 = vmatprep.mubr.bf16.mxu0 0
    %668 = vmatmul.mubr.bf16.gmra.mrb[0].mxu0 %v143
    %v669 = vpop.f32.mrb[0].mxu0
    %v670 = vadd.f32 0.0, %v669
    %v671 = vpop.f32.mrb[0].mxu0
    %v672 = vpop.f32.mrb[0].mxu0
    %v673 = vadd.f32 0.0, %v672
    %v674 = vpop.f32.mrb[0].mxu0
    %675 = vmatprep.mubr.bf16.mxu0 0
    %676 = vmatmul.mubr.bf16.gmra.mrb[0].mxu0 %v144
    %v677 = vpop.f32.mrb[0].mxu0
    %v678 = vadd.f32 0.0, %v677
    %v679 = vpop.f32.mrb[0].mxu0
    %v680 = vpop.f32.mrb[0].mxu0
    %v681 = vadd.f32 0.0, %v680
    %v682 = vpop.f32.mrb[0].mxu0
    %683 = vmatprep.mubr.bf16.mxu0 0
    %684 = vmatmul.mubr.bf16.gmra.mrb[0].mxu0 %v145
    %v685 = vpop.f32.mrb[0].mxu0
    %v686 = vadd.f32 0.0, %v685
    %v687 = vpop.f32.mrb[0].mxu0
    %v688 = vpop.f32.mrb[0].mxu0
    %v689 = vadd.f32 0.0, %v688
    %v690 = vpop.f32.mrb[0].mxu0
    %691 = vdwg.mxu0
    %692 = vst [vmem:[#allocation2] sm:$0xff] %v587
    %693 = vst [vmem:[#allocation2 + $0x10] sm:$0xff] %v588
    %694 = vst [vmem:[#allocation2 + $0x20] sm:$0xff] %v589
    %695 = vst [vmem:[#allocation2 + $0x30] sm:$0xff] %v590
    %696 = vst [vmem:[#allocation2 + $0x40] sm:$0xff] %v591
    %697 = vst [vmem:[#allocation2 + $0x50] sm:$0xff] %v592
    %698 = vst [vmem:[#allocation2 + $0x60] sm:$0xff] %v593
    %699 = vst [vmem:[#allocation2 + $0x70] sm:$0xff] %v594
    %v700 = vpack.c.bf16 %v633, %v630
    %v701 = vpack.c.bf16 %v641, %v638
    %v702 = vpack.c.bf16 %v649, %v646
    %v703 = vpack.c.bf16 %v657, %v654
    %v704 = vpack.c.bf16 %v665, %v662
    %v705 = vpack.c.bf16 %v673, %v670
    %v706 = vpack.c.bf16 %v681, %v678
    %v707 = vpack.c.bf16 %v689, %v686
    %708 = vst [vmem:[#allocation2 + $0x8] sm:$0xff] %v700
    %709 = vst [vmem:[#allocation2 + $0x18] sm:$0xff] %v701
    %710 = vst [vmem:[#allocation2 + $0x28] sm:$0xff] %v702
    %711 = vst [vmem:[#allocation2 + $0x38] sm:$0xff] %v703
    %712 = vst [vmem:[#allocation2 + $0x48] sm:$0xff] %v704
    %713 = vst [vmem:[#allocation2 + $0x58] sm:$0xff] %v705
    %714 = vst [vmem:[#allocation2 + $0x68] sm:$0xff] %v706
    %715 = vst [vmem:[#allocation2 + $0x78] sm:$0xff] %v707
    %v716 = vld [vmem:[#allocation2] sm:$0xff]
    %v717 = vld [vmem:[#allocation2 + $0x8] sm:$0xff]
    %v718 = vld [vmem:[#allocation2 + $0x10] sm:$0xff]
    %v719 = vld [vmem:[#allocation2 + $0x18] sm:$0xff]
    %v720 = vld [vmem:[#allocation2 + $0x20] sm:$0xff]
    %v721 = vld [vmem:[#allocation2 + $0x28] sm:$0xff]
    %v722 = vld [vmem:[#allocation2 + $0x30] sm:$0xff]
    %v723 = vld [vmem:[#allocation2 + $0x38] sm:$0xff]
    %v724 = vld [vmem:[#allocation2 + $0x40] sm:$0xff]
    %v725 = vld [vmem:[#allocation2 + $0x48] sm:$0xff]
    %v726 = vld [vmem:[#allocation2 + $0x50] sm:$0xff]
    %v727 = vld [vmem:[#allocation2 + $0x58] sm:$0xff]
    %v728 = vld [vmem:[#allocation2 + $0x60] sm:$0xff]
    %v729 = vld [vmem:[#allocation2 + $0x68] sm:$0xff]
    %v730 = vld [vmem:[#allocation2 + $0x70] sm:$0xff]
    %v731 = vld [vmem:[#allocation2 + $0x78] sm:$0xff]
    %s732 = scalar_lea.vmem [#allocation8], 128
    %v733 = vld [vmem:[%s732] sm:$0xf]
    %v734 = vld [vmem:[%s732 + $0x4] sm:$0xf]
    %v735 = vld [vmem:[%s732 + $0x8] sm:$0xf]
    %v736 = vld [vmem:[%s732 + $0xc] sm:$0xf]
    %v737 = vld [vmem:[%s732 + $0x10] sm:$0xf]
    %v738 = vld [vmem:[%s732 + $0x14] sm:$0xf]
    %v739 = vld [vmem:[%s732 + $0x18] sm:$0xf]
    %v740 = vld [vmem:[%s732 + $0x1c] sm:$0xf]
    %v741 = vld [vmem:[%s732 + $0x20] sm:$0xf]
    %v742 = vld [vmem:[%s732 + $0x24] sm:$0xf]
    %v743 = vld [vmem:[%s732 + $0x28] sm:$0xf]
    %v744 = vld [vmem:[%s732 + $0x2c] sm:$0xf]
    %v745 = vld [vmem:[%s732 + $0x30] sm:$0xf]
    %v746 = vld [vmem:[%s732 + $0x34] sm:$0xf]
    %v747 = vld [vmem:[%s732 + $0x38] sm:$0xf]
    %v748 = vld [vmem:[%s732 + $0x3c] sm:$0xf]
    %v749 = vld [vmem:[%s732 + $0x40] sm:$0xf]
    %v750 = vld [vmem:[%s732 + $0x44] sm:$0xf]
    %v751 = vld [vmem:[%s732 + $0x48] sm:$0xf]
    %v752 = vld [vmem:[%s732 + $0x4c] sm:$0xf]
    %v753 = vld [vmem:[%s732 + $0x50] sm:$0xf]
    %v754 = vld [vmem:[%s732 + $0x54] sm:$0xf]
    %v755 = vld [vmem:[%s732 + $0x58] sm:$0xf]
    %v756 = vld [vmem:[%s732 + $0x5c] sm:$0xf]
    %v757 = vld [vmem:[%s732 + $0x60] sm:$0xf]
    %v758 = vld [vmem:[%s732 + $0x64] sm:$0xf]
    %v759 = vld [vmem:[%s732 + $0x68] sm:$0xf]
    %v760 = vld [vmem:[%s732 + $0x6c] sm:$0xf]
    %v761 = vld [vmem:[%s732 + $0x70] sm:$0xf]
    %v762 = vld [vmem:[%s732 + $0x74] sm:$0xf]
    %v763 = vld [vmem:[%s732 + $0x78] sm:$0xf]
    %v764 = vld [vmem:[%s732 + $0x7c] sm:$0xf]
    %s765 = scalar_lea.vmem [#allocation9], 1
    %v766 = vld [vmem:[%s765] sm:$0x1]
    %v768 = vlaneseq
    %v769 = vshrl.u32 %v768, 7
    %v770 = vsub.s32 0, %v769
    %v771 = vrot.slane %v766, %v770
    %v805 = vunpack.c.l.b16 %v733
    %v806 = vunpack.c.l.b16 %v734
    %v807 = vunpack.c.l.b16 %v735
    %v808 = vunpack.c.l.b16 %v736
    %v809 = vunpack.c.l.b16 %v737
    %v810 = vunpack.c.l.b16 %v738
    %v811 = vunpack.c.l.b16 %v739
    %v812 = vunpack.c.l.b16 %v740
    %v813 = vunpack.c.l.b16 %v741
    %v814 = vunpack.c.l.b16 %v742
    %v815 = vunpack.c.l.b16 %v743
    %v816 = vunpack.c.l.b16 %v744
    %v817 = vunpack.c.l.b16 %v745
    %v818 = vunpack.c.l.b16 %v746
    %v819 = vunpack.c.l.b16 %v747
    %v820 = vunpack.c.l.b16 %v748
    %v821 = vunpack.c.l.b16 %v749
    %v822 = vunpack.c.l.b16 %v750
    %v823 = vunpack.c.l.b16 %v751
    %v824 = vunpack.c.l.b16 %v752
    %v825 = vunpack.c.l.b16 %v753
    %v826 = vunpack.c.l.b16 %v754
    %v827 = vunpack.c.l.b16 %v755
    %v828 = vunpack.c.l.b16 %v756
    %v829 = vunpack.c.l.b16 %v757
    %v830 = vunpack.c.l.b16 %v758
    %v831 = vunpack.c.l.b16 %v759
    %v832 = vunpack.c.l.b16 %v760
    %v833 = vunpack.c.l.b16 %v761
    %v834 = vunpack.c.l.b16 %v762
    %v835 = vunpack.c.l.b16 %v763
    %v836 = vunpack.c.l.b16 %v764
    %v837 = vpack.c.b16 %v806, %v805
    %v838 = vpack.c.b16 %v808, %v807
    %v839 = vpack.c.b16 %v810, %v809
    %v840 = vpack.c.b16 %v812, %v811
    %v841 = vpack.c.b16 %v814, %v813
    %v842 = vpack.c.b16 %v816, %v815
    %v843 = vpack.c.b16 %v818, %v817
    %v844 = vpack.c.b16 %v820, %v819
    %v845 = vpack.c.b16 %v822, %v821
    %v846 = vpack.c.b16 %v824, %v823
    %v847 = vpack.c.b16 %v826, %v825
    %v848 = vpack.c.b16 %v828, %v827
    %v849 = vpack.c.b16 %v830, %v829
    %v850 = vpack.c.b16 %v832, %v831
    %v851 = vpack.c.b16 %v834, %v833
    %v852 = vpack.c.b16 %v836, %v835
    %869 = vmatprep.subr.bf16.mxu0 0
    %870 = vmatpush1.bf16.msra.mxu0 %v837
    %871 = vmatprep.subr.bf16.mxu0 0
    %872 = vmatpush1.bf16.msra.mxu0 %v838
    %873 = vmatprep.subr.bf16.mxu0 0
    %874 = vmatpush1.bf16.msra.mxu0 %v839
    %875 = vmatprep.subr.bf16.mxu0 0
    %876 = vmatpush1.bf16.msra.mxu0 %v840
    %877 = vmatprep.subr.bf16.mxu0 0
    %878 = vmatpush1.bf16.msra.mxu0 %v841
    %879 = vmatprep.subr.bf16.mxu0 0
    %880 = vmatpush1.bf16.msra.mxu0 %v842
    %881 = vmatprep.subr.bf16.mxu0 0
    %882 = vmatpush1.bf16.msra.mxu0 %v843
    %883 = vmatprep.subr.bf16.mxu0 0
    %884 = vmatpush1.bf16.msra.mxu0 %v844
    %885 = vmatprep.subr.bf16.mxu0 0
    %886 = vmatpush1.bf16.msra.mxu0 %v845
    %887 = vmatprep.subr.bf16.mxu0 0
    %888 = vmatpush1.bf16.msra.mxu0 %v846
    %889 = vmatprep.subr.bf16.mxu0 0
    %890 = vmatpush1.bf16.msra.mxu0 %v847
    %891 = vmatprep.subr.bf16.mxu0 0
    %892 = vmatpush1.bf16.msra.mxu0 %v848
    %893 = vmatprep.subr.bf16.mxu0 0
    %894 = vmatpush1.bf16.msra.mxu0 %v849
    %895 = vmatprep.subr.bf16.mxu0 0
    %896 = vmatpush1.bf16.msra.mxu0 %v850
    %897 = vmatprep.subr.bf16.mxu0 0
    %898 = vmatpush1.bf16.msra.mxu0 %v851
    %899 = vmatprep.subr.bf16.mxu0 0
    %900 = vmatpush1.bf16.msra.mxu0 %v852
    %901 = vmatprep.mubr.bf16.mxu0 %v717
    %902 = vmatmul.mubr.bf16.gmra.mrb[0].mxu0 %v716
    %v903 = vpop.f32.mrb[0].mxu0
    %v904 = vadd.f32 %v771, %v903
    %v905 = vpop.f32.mrb[0].mxu0
    %v906 = vpop.f32.mrb[0].mxu0
    %v907 = vadd.f32 %v771, %v906
    %v908 = vpop.f32.mrb[0].mxu0
    %909 = vmatprep.mubr.bf16.mxu0 %v719
    %910 = vmatmul.mubr.bf16.gmra.mrb[0].mxu0 %v718
    %v911 = vpop.f32.mrb[0].mxu0
    %v912 = vadd.f32 %v771, %v911
    %v913 = vpop.f32.mrb[0].mxu0
    %v914 = vpop.f32.mrb[0].mxu0
    %v915 = vadd.f32 %v771, %v914
    %v916 = vpop.f32.mrb[0].mxu0
    %917 = vmatprep.mubr.bf16.mxu0 %v721
    %918 = vmatmul.mubr.bf16.gmra.mrb[0].mxu0 %v720
    %v919 = vpop.f32.mrb[0].mxu0
    %v920 = vadd.f32 %v771, %v919
    %v921 = vpop.f32.mrb[0].mxu0
    %v922 = vpop.f32.mrb[0].mxu0
    %v923 = vadd.f32 %v771, %v922
    %v924 = vpop.f32.mrb[0].mxu0
    %925 = vmatprep.mubr.bf16.mxu0 %v723
    %926 = vmatmul.mubr.bf16.gmra.mrb[0].mxu0 %v722
    %v927 = vpop.f32.mrb[0].mxu0
    %v928 = vadd.f32 %v771, %v927
    %v929 = vpop.f32.mrb[0].mxu0
    %v930 = vpop.f32.mrb[0].mxu0
    %v931 = vadd.f32 %v771, %v930
    %v932 = vpop.f32.mrb[0].mxu0
    %933 = vmatprep.mubr.bf16.mxu0 %v725
    %934 = vmatmul.mubr.bf16.gmra.mrb[0].mxu0 %v724
    %v935 = vpop.f32.mrb[0].mxu0
    %v936 = vadd.f32 %v771, %v935
    %v937 = vpop.f32.mrb[0].mxu0
    %v938 = vpop.f32.mrb[0].mxu0
    %v939 = vadd.f32 %v771, %v938
    %v940 = vpop.f32.mrb[0].mxu0
    %941 = vmatprep.mubr.bf16.mxu0 %v727
    %942 = vmatmul.mubr.bf16.gmra.mrb[0].mxu0 %v726
    %v943 = vpop.f32.mrb[0].mxu0
    %v944 = vadd.f32 %v771, %v943
    %v945 = vpop.f32.mrb[0].mxu0
    %v946 = vpop.f32.mrb[0].mxu0
    %v947 = vadd.f32 %v771, %v946
    %v948 = vpop.f32.mrb[0].mxu0
    %949 = vmatprep.mubr.bf16.mxu0 %v729
    %950 = vmatmul.mubr.bf16.gmra.mrb[0].mxu0 %v728
    %v951 = vpop.f32.mrb[0].mxu0
    %v952 = vadd.f32 %v771, %v951
    %v953 = vpop.f32.mrb[0].mxu0
    %v954 = vpop.f32.mrb[0].mxu0
    %v955 = vadd.f32 %v771, %v954
    %v956 = vpop.f32.mrb[0].mxu0
    %957 = vmatprep.mubr.bf16.mxu0 %v731
    %958 = vmatmul.mubr.bf16.gmra.mrb[0].mxu0 %v730
    %v959 = vpop.f32.mrb[0].mxu0
    %v960 = vadd.f32 %v771, %v959
    %v961 = vpop.f32.mrb[0].mxu0
    %v962 = vpop.f32.mrb[0].mxu0
    %v963 = vadd.f32 %v771, %v962
    %v964 = vpop.f32.mrb[0].mxu0
    %965 = vdwg.mxu0
    %v966 = vmax.f32 %v904, 0.0
    %v967 = vmax.f32 %v907, 0.0
    %v968 = vmax.f32 %v912, 0.0
    %v969 = vmax.f32 %v915, 0.0
    %v970 = vmax.f32 %v920, 0.0
    %v971 = vmax.f32 %v923, 0.0
    %v972 = vmax.f32 %v928, 0.0
    %v973 = vmax.f32 %v931, 0.0
    %v974 = vmax.f32 %v936, 0.0
    %v975 = vmax.f32 %v939, 0.0
    %v976 = vmax.f32 %v944, 0.0
    %v977 = vmax.f32 %v947, 0.0
    %v978 = vmax.f32 %v952, 0.0
    %v979 = vmax.f32 %v955, 0.0
    %v980 = vmax.f32 %v960, 0.0
    %v981 = vmax.f32 %v963, 0.0
    %v982 = vpack.c.bf16 %v967, %v966
    %v983 = vpack.c.bf16 %v969, %v968
    %v984 = vpack.c.bf16 %v971, %v970
    %v985 = vpack.c.bf16 %v973, %v972
    %v986 = vpack.c.bf16 %v975, %v974
    %v987 = vpack.c.bf16 %v977, %v976
    %v988 = vpack.c.bf16 %v979, %v978
    %v989 = vpack.c.bf16 %v981, %v980
    %990 = vmatprep.subr.bf16.mxu0 0
    %991 = vmatpush1.bf16.msra.mxu0 %v982
    %992 = vmatprep.subr.bf16.mxu0 0
    %993 = vmatpush1.bf16.msra.mxu0 %v983
    %994 = vmatprep.subr.bf16.mxu0 0
    %995 = vmatpush1.bf16.msra.mxu0 %v984
    %996 = vmatprep.subr.bf16.mxu0 0
    %997 = vmatpush1.bf16.msra.mxu0 %v985
    %998 = vmatprep.subr.bf16.mxu0 0
    %999 = vmatpush1.bf16.msra.mxu0 %v986
    %1000 = vmatprep.subr.bf16.mxu0 0
    %1001 = vmatpush1.bf16.msra.mxu0 %v987
    %1002 = vmatprep.subr.bf16.mxu0 0
    %1003 = vmatpush1.bf16.msra.mxu0 %v988
    %1004 = vmatprep.subr.bf16.mxu0 0
    %1005 = vmatpush1.bf16.msra.mxu0 %v989
    %1006 = vmatprep.subr.bf16.mxu0 0
    %1007 = vmatpush1.bf16.msra.mxu0 0
    %1008 = vmatprep.subr.bf16.mxu0 0
    %1009 = vmatpush1.bf16.msra.mxu0 0
    %1010 = vmatprep.subr.bf16.mxu0 0
    %1011 = vmatpush1.bf16.msra.mxu0 0
    %1012 = vmatprep.subr.bf16.mxu0 0
    %1013 = vmatpush1.bf16.msra.mxu0 0
    %1014 = vmatprep.subr.bf16.mxu0 0
    %1015 = vmatpush1.bf16.msra.mxu0 0
    %1016 = vmatprep.subr.bf16.mxu0 0
    %1017 = vmatpush1.bf16.msra.mxu0 0
    %1018 = vmatprep.subr.bf16.mxu0 0
    %1019 = vmatpush1.bf16.msra.mxu0 0
    %1020 = vmatprep.subr.bf16.mxu0 0
    %1021 = vmatpush1.bf16.msra.mxu0 0
    %1022 = vmatprep.mubr.bf16.mxu0 0
    %1023 = vmatmul.mubr.bf16.gmra.mrb[0].mxu0 %v138
    %v1024 = vpop.f32.mrb[0].mxu0
    %v1025 = vadd.f32 0.0, %v1024
    %v1026 = vpop.f32.mrb[0].mxu0
    %v1027 = vpop.f32.mrb[0].mxu0
    %v1028 = vadd.f32 0.0, %v1027
    %v1029 = vpop.f32.mrb[0].mxu0
    %1030 = vmatprep.mubr.bf16.mxu0 0
    %1031 = vmatmul.mubr.bf16.gmra.mrb[0].mxu0 %v139
    %v1032 = vpop.f32.mrb[0].mxu0
    %v1033 = vadd.f32 0.0, %v1032
    %v1034 = vpop.f32.mrb[0].mxu0
    %v1035 = vpop.f32.mrb[0].mxu0
    %v1036 = vadd.f32 0.0, %v1035
    %v1037 = vpop.f32.mrb[0].mxu0
    %1038 = vmatprep.mubr.bf16.mxu0 0
    %1039 = vmatmul.mubr.bf16.gmra.mrb[0].mxu0 %v140
    %v1040 = vpop.f32.mrb[0].mxu0
    %v1041 = vadd.f32 0.0, %v1040
    %v1042 = vpop.f32.mrb[0].mxu0
    %v1043 = vpop.f32.mrb[0].mxu0
    %v1044 = vadd.f32 0.0, %v1043
    %v1045 = vpop.f32.mrb[0].mxu0
    %1046 = vmatprep.mubr.bf16.mxu0 0
    %1047 = vmatmul.mubr.bf16.gmra.mrb[0].mxu0 %v141
    %v1048 = vpop.f32.mrb[0].mxu0
    %v1049 = vadd.f32 0.0, %v1048
    %v1050 = vpop.f32.mrb[0].mxu0
    %v1051 = vpop.f32.mrb[0].mxu0
    %v1052 = vadd.f32 0.0, %v1051
    %v1053 = vpop.f32.mrb[0].mxu0
    %1054 = vmatprep.mubr.bf16.mxu0 0
    %1055 = vmatmul.mubr.bf16.gmra.mrb[0].mxu0 %v142
    %v1056 = vpop.f32.mrb[0].mxu0
    %v1057 = vadd.f32 0.0, %v1056
    %v1058 = vpop.f32.mrb[0].mxu0
    %v1059 = vpop.f32.mrb[0].mxu0
    %v1060 = vadd.f32 0.0, %v1059
    %v1061 = vpop.f32.mrb[0].mxu0
    %1062 = vmatprep.mubr.bf16.mxu0 0
    %1063 = vmatmul.mubr.bf16.gmra.mrb[0].mxu0 %v143
    %v1064 = vpop.f32.mrb[0].mxu0
    %v1065 = vadd.f32 0.0, %v1064
    %v1066 = vpop.f32.mrb[0].mxu0
    %v1067 = vpop.f32.mrb[0].mxu0
    %v1068 = vadd.f32 0.0, %v1067
    %v1069 = vpop.f32.mrb[0].mxu0
    %1070 = vmatprep.mubr.bf16.mxu0 0
    %1071 = vmatmul.mubr.bf16.gmra.mrb[0].mxu0 %v144
    %v1072 = vpop.f32.mrb[0].mxu0
    %v1073 = vadd.f32 0.0, %v1072
    %v1074 = vpop.f32.mrb[0].mxu0
    %v1075 = vpop.f32.mrb[0].mxu0
    %v1076 = vadd.f32 0.0, %v1075
    %v1077 = vpop.f32.mrb[0].mxu0
    %1078 = vmatprep.mubr.bf16.mxu0 0
    %1079 = vmatmul.mubr.bf16.gmra.mrb[0].mxu0 %v145
    %v1080 = vpop.f32.mrb[0].mxu0
    %v1081 = vadd.f32 0.0, %v1080
    %v1082 = vpop.f32.mrb[0].mxu0
    %v1083 = vpop.f32.mrb[0].mxu0
    %v1084 = vadd.f32 0.0, %v1083
    %v1085 = vpop.f32.mrb[0].mxu0
    %1086 = vdwg.mxu0
    %1087 = vst [vmem:[#allocation2] sm:$0xff] %v982
    %1088 = vst [vmem:[#allocation2 + $0x10] sm:$0xff] %v983
    %1089 = vst [vmem:[#allocation2 + $0x20] sm:$0xff] %v984
    %1090 = vst [vmem:[#allocation2 + $0x30] sm:$0xff] %v985
    %1091 = vst [vmem:[#allocation2 + $0x40] sm:$0xff] %v986
    %1092 = vst [vmem:[#allocation2 + $0x50] sm:$0xff] %v987
    %1093 = vst [vmem:[#allocation2 + $0x60] sm:$0xff] %v988
    %1094 = vst [vmem:[#allocation2 + $0x70] sm:$0xff] %v989
    %v1095 = vpack.c.bf16 %v1028, %v1025
    %v1096 = vpack.c.bf16 %v1036, %v1033
    %v1097 = vpack.c.bf16 %v1044, %v1041
    %v1098 = vpack.c.bf16 %v1052, %v1049
    %v1099 = vpack.c.bf16 %v1060, %v1057
    %v1100 = vpack.c.bf16 %v1068, %v1065
    %v1101 = vpack.c.bf16 %v1076, %v1073
    %v1102 = vpack.c.bf16 %v1084, %v1081
    %1103 = vst [vmem:[#allocation2 + $0x8] sm:$0xff] %v1095
    %1104 = vst [vmem:[#allocation2 + $0x18] sm:$0xff] %v1096
    %1105 = vst [vmem:[#allocation2 + $0x28] sm:$0xff] %v1097
    %1106 = vst [vmem:[#allocation2 + $0x38] sm:$0xff] %v1098
    %1107 = vst [vmem:[#allocation2 + $0x48] sm:$0xff] %v1099
    %1108 = vst [vmem:[#allocation2 + $0x58] sm:$0xff] %v1100
    %1109 = vst [vmem:[#allocation2 + $0x68] sm:$0xff] %v1101
    %1110 = vst [vmem:[#allocation2 + $0x78] sm:$0xff] %v1102
    %v1111 = vld [vmem:[#allocation2] sm:$0xff]
    %v1112 = vld [vmem:[#allocation2 + $0x8] sm:$0xff]
    %v1113 = vld [vmem:[#allocation2 + $0x10] sm:$0xff]
    %v1114 = vld [vmem:[#allocation2 + $0x18] sm:$0xff]
    %v1115 = vld [vmem:[#allocation2 + $0x20] sm:$0xff]
    %v1116 = vld [vmem:[#allocation2 + $0x28] sm:$0xff]
    %v1117 = vld [vmem:[#allocation2 + $0x30] sm:$0xff]
    %v1118 = vld [vmem:[#allocation2 + $0x38] sm:$0xff]
    %v1119 = vld [vmem:[#allocation2 + $0x40] sm:$0xff]
    %v1120 = vld [vmem:[#allocation2 + $0x48] sm:$0xff]
    %v1121 = vld [vmem:[#allocation2 + $0x50] sm:$0xff]
    %v1122 = vld [vmem:[#allocation2 + $0x58] sm:$0xff]
    %v1123 = vld [vmem:[#allocation2 + $0x60] sm:$0xff]
    %v1124 = vld [vmem:[#allocation2 + $0x68] sm:$0xff]
    %v1125 = vld [vmem:[#allocation2 + $0x70] sm:$0xff]
    %v1126 = vld [vmem:[#allocation2 + $0x78] sm:$0xff]
    %s1127 = scalar_lea.vmem [#allocation8], 256
    %v1128 = vld [vmem:[%s1127] sm:$0xf]
    %v1129 = vld [vmem:[%s1127 + $0x4] sm:$0xf]
    %v1130 = vld [vmem:[%s1127 + $0x8] sm:$0xf]
    %v1131 = vld [vmem:[%s1127 + $0xc] sm:$0xf]
    %v1132 = vld [vmem:[%s1127 + $0x10] sm:$0xf]
    %v1133 = vld [vmem:[%s1127 + $0x14] sm:$0xf]
    %v1134 = vld [vmem:[%s1127 + $0x18] sm:$0xf]
    %v1135 = vld [vmem:[%s1127 + $0x1c] sm:$0xf]
    %v1136 = vld [vmem:[%s1127 + $0x20] sm:$0xf]
    %v1137 = vld [vmem:[%s1127 + $0x24] sm:$0xf]
    %v1138 = vld [vmem:[%s1127 + $0x28] sm:$0xf]
    %v1139 = vld [vmem:[%s1127 + $0x2c] sm:$0xf]
    %v1140 = vld [vmem:[%s1127 + $0x30] sm:$0xf]
    %v1141 = vld [vmem:[%s1127 + $0x34] sm:$0xf]
    %v1142 = vld [vmem:[%s1127 + $0x38] sm:$0xf]
    %v1143 = vld [vmem:[%s1127 + $0x3c] sm:$0xf]
    %v1144 = vld [vmem:[%s1127 + $0x40] sm:$0xf]
    %v1145 = vld [vmem:[%s1127 + $0x44] sm:$0xf]
    %v1146 = vld [vmem:[%s1127 + $0x48] sm:$0xf]
    %v1147 = vld [vmem:[%s1127 + $0x4c] sm:$0xf]
    %v1148 = vld [vmem:[%s1127 + $0x50] sm:$0xf]
    %v1149 = vld [vmem:[%s1127 + $0x54] sm:$0xf]
    %v1150 = vld [vmem:[%s1127 + $0x58] sm:$0xf]
    %v1151 = vld [vmem:[%s1127 + $0x5c] sm:$0xf]
    %v1152 = vld [vmem:[%s1127 + $0x60] sm:$0xf]
    %v1153 = vld [vmem:[%s1127 + $0x64] sm:$0xf]
    %v1154 = vld [vmem:[%s1127 + $0x68] sm:$0xf]
    %v1155 = vld [vmem:[%s1127 + $0x6c] sm:$0xf]
    %v1156 = vld [vmem:[%s1127 + $0x70] sm:$0xf]
    %v1157 = vld [vmem:[%s1127 + $0x74] sm:$0xf]
    %v1158 = vld [vmem:[%s1127 + $0x78] sm:$0xf]
    %v1159 = vld [vmem:[%s1127 + $0x7c] sm:$0xf]
    %s1160 = scalar_lea.vmem [#allocation9], 2
    %v1161 = vld [vmem:[%s1160] sm:$0x1]
    %v1163 = vlaneseq
    %v1164 = vshrl.u32 %v1163, 7
    %v1165 = vsub.s32 0, %v1164
    %v1166 = vrot.slane %v1161, %v1165
    %v1200 = vunpack.c.l.b16 %v1128
    %v1201 = vunpack.c.l.b16 %v1129
    %v1202 = vunpack.c.l.b16 %v1130
    %v1203 = vunpack.c.l.b16 %v1131
    %v1204 = vunpack.c.l.b16 %v1132
    %v1205 = vunpack.c.l.b16 %v1133
    %v1206 = vunpack.c.l.b16 %v1134
    %v1207 = vunpack.c.l.b16 %v1135
    %v1208 = vunpack.c.l.b16 %v1136
    %v1209 = vunpack.c.l.b16 %v1137
    %v1210 = vunpack.c.l.b16 %v1138
    %v1211 = vunpack.c.l.b16 %v1139
    %v1212 = vunpack.c.l.b16 %v1140
    %v1213 = vunpack.c.l.b16 %v1141
    %v1214 = vunpack.c.l.b16 %v1142
    %v1215 = vunpack.c.l.b16 %v1143
    %v1216 = vunpack.c.l.b16 %v1144
    %v1217 = vunpack.c.l.b16 %v1145
    %v1218 = vunpack.c.l.b16 %v1146
    %v1219 = vunpack.c.l.b16 %v1147
    %v1220 = vunpack.c.l.b16 %v1148
    %v1221 = vunpack.c.l.b16 %v1149
    %v1222 = vunpack.c.l.b16 %v1150
    %v1223 = vunpack.c.l.b16 %v1151
    %v1224 = vunpack.c.l.b16 %v1152
    %v1225 = vunpack.c.l.b16 %v1153
    %v1226 = vunpack.c.l.b16 %v1154
    %v1227 = vunpack.c.l.b16 %v1155
    %v1228 = vunpack.c.l.b16 %v1156
    %v1229 = vunpack.c.l.b16 %v1157
    %v1230 = vunpack.c.l.b16 %v1158
    %v1231 = vunpack.c.l.b16 %v1159
    %v1232 = vpack.c.b16 %v1201, %v1200
    %v1233 = vpack.c.b16 %v1203, %v1202
    %v1234 = vpack.c.b16 %v1205, %v1204
    %v1235 = vpack.c.b16 %v1207, %v1206
    %v1236 = vpack.c.b16 %v1209, %v1208
    %v1237 = vpack.c.b16 %v1211, %v1210
    %v1238 = vpack.c.b16 %v1213, %v1212
    %v1239 = vpack.c.b16 %v1215, %v1214
    %v1240 = vpack.c.b16 %v1217, %v1216
    %v1241 = vpack.c.b16 %v1219, %v1218
    %v1242 = vpack.c.b16 %v1221, %v1220
    %v1243 = vpack.c.b16 %v1223, %v1222
    %v1244 = vpack.c.b16 %v1225, %v1224
    %v1245 = vpack.c.b16 %v1227, %v1226
    %v1246 = vpack.c.b16 %v1229, %v1228
    %v1247 = vpack.c.b16 %v1231, %v1230
    %1264 = vmatprep.subr.bf16.mxu0 0
    %1265 = vmatpush1.bf16.msra.mxu0 %v1232
    %1266 = vmatprep.subr.bf16.mxu0 0
    %1267 = vmatpush1.bf16.msra.mxu0 %v1233
    %1268 = vmatprep.subr.bf16.mxu0 0
    %1269 = vmatpush1.bf16.msra.mxu0 %v1234
    %1270 = vmatprep.subr.bf16.mxu0 0
    %1271 = vmatpush1.bf16.msra.mxu0 %v1235
    %1272 = vmatprep.subr.bf16.mxu0 0
    %1273 = vmatpush1.bf16.msra.mxu0 %v1236
    %1274 = vmatprep.subr.bf16.mxu0 0
    %1275 = vmatpush1.bf16.msra.mxu0 %v1237
    %1276 = vmatprep.subr.bf16.mxu0 0
    %1277 = vmatpush1.bf16.msra.mxu0 %v1238
    %1278 = vmatprep.subr.bf16.mxu0 0
    %1279 = vmatpush1.bf16.msra.mxu0 %v1239
    %1280 = vmatprep.subr.bf16.mxu0 0
    %1281 = vmatpush1.bf16.msra.mxu0 %v1240
    %1282 = vmatprep.subr.bf16.mxu0 0
    %1283 = vmatpush1.bf16.msra.mxu0 %v1241
    %1284 = vmatprep.subr.bf16.mxu0 0
    %1285 = vmatpush1.bf16.msra.mxu0 %v1242
    %1286 = vmatprep.subr.bf16.mxu0 0
    %1287 = vmatpush1.bf16.msra.mxu0 %v1243
    %1288 = vmatprep.subr.bf16.mxu0 0
    %1289 = vmatpush1.bf16.msra.mxu0 %v1244
    %1290 = vmatprep.subr.bf16.mxu0 0
    %1291 = vmatpush1.bf16.msra.mxu0 %v1245
    %1292 = vmatprep.subr.bf16.mxu0 0
    %1293 = vmatpush1.bf16.msra.mxu0 %v1246
    %1294 = vmatprep.subr.bf16.mxu0 0
    %1295 = vmatpush1.bf16.msra.mxu0 %v1247
    %1296 = vmatprep.mubr.bf16.mxu0 %v1112
    %1297 = vmatmul.mubr.bf16.gmra.mrb[0].mxu0 %v1111
    %v1298 = vpop.f32.mrb[0].mxu0
    %v1299 = vadd.f32 %v1166, %v1298
    %v1300 = vpop.f32.mrb[0].mxu0
    %v1301 = vpop.f32.mrb[0].mxu0
    %v1302 = vadd.f32 %v1166, %v1301
    %v1303 = vpop.f32.mrb[0].mxu0
    %1304 = vmatprep.mubr.bf16.mxu0 %v1114
    %1305 = vmatmul.mubr.bf16.gmra.mrb[0].mxu0 %v1113
    %v1306 = vpop.f32.mrb[0].mxu0
    %v1307 = vadd.f32 %v1166, %v1306
    %v1308 = vpop.f32.mrb[0].mxu0
    %v1309 = vpop.f32.mrb[0].mxu0
    %v1310 = vadd.f32 %v1166, %v1309
    %v1311 = vpop.f32.mrb[0].mxu0
    %1312 = vmatprep.mubr.bf16.mxu0 %v1116
    %1313 = vmatmul.mubr.bf16.gmra.mrb[0].mxu0 %v1115
    %v1314 = vpop.f32.mrb[0].mxu0
    %v1315 = vadd.f32 %v1166, %v1314
    %v1316 = vpop.f32.mrb[0].mxu0
    %v1317 = vpop.f32.mrb[0].mxu0
    %v1318 = vadd.f32 %v1166, %v1317
    %v1319 = vpop.f32.mrb[0].mxu0
    %1320 = vmatprep.mubr.bf16.mxu0 %v1118
    %1321 = vmatmul.mubr.bf16.gmra.mrb[0].mxu0 %v1117
    %v1322 = vpop.f32.mrb[0].mxu0
    %v1323 = vadd.f32 %v1166, %v1322
    %v1324 = vpop.f32.mrb[0].mxu0
    %v1325 = vpop.f32.mrb[0].mxu0
    %v1326 = vadd.f32 %v1166, %v1325
    %v1327 = vpop.f32.mrb[0].mxu0
    %1328 = vmatprep.mubr.bf16.mxu0 %v1120
    %1329 = vmatmul.mubr.bf16.gmra.mrb[0].mxu0 %v1119
    %v1330 = vpop.f32.mrb[0].mxu0
    %v1331 = vadd.f32 %v1166, %v1330
    %v1332 = vpop.f32.mrb[0].mxu0
    %v1333 = vpop.f32.mrb[0].mxu0
    %v1334 = vadd.f32 %v1166, %v1333
    %v1335 = vpop.f32.mrb[0].mxu0
    %1336 = vmatprep.mubr.bf16.mxu0 %v1122
    %1337 = vmatmul.mubr.bf16.gmra.mrb[0].mxu0 %v1121
    %v1338 = vpop.f32.mrb[0].mxu0
    %v1339 = vadd.f32 %v1166, %v1338
    %v1340 = vpop.f32.mrb[0].mxu0
    %v1341 = vpop.f32.mrb[0].mxu0
    %v1342 = vadd.f32 %v1166, %v1341
    %v1343 = vpop.f32.mrb[0].mxu0
    %1344 = vmatprep.mubr.bf16.mxu0 %v1124
    %1345 = vmatmul.mubr.bf16.gmra.mrb[0].mxu0 %v1123
    %v1346 = vpop.f32.mrb[0].mxu0
    %v1347 = vadd.f32 %v1166, %v1346
    %v1348 = vpop.f32.mrb[0].mxu0
    %v1349 = vpop.f32.mrb[0].mxu0
    %v1350 = vadd.f32 %v1166, %v1349
    %v1351 = vpop.f32.mrb[0].mxu0
    %1352 = vmatprep.mubr.bf16.mxu0 %v1126
    %1353 = vmatmul.mubr.bf16.gmra.mrb[0].mxu0 %v1125
    %v1354 = vpop.f32.mrb[0].mxu0
    %v1355 = vadd.f32 %v1166, %v1354
    %v1356 = vpop.f32.mrb[0].mxu0
    %v1357 = vpop.f32.mrb[0].mxu0
    %v1358 = vadd.f32 %v1166, %v1357
    %v1359 = vpop.f32.mrb[0].mxu0
    %1360 = vdwg.mxu0
    %1361 = vst [vmem:[#allocation11] sm:$0xff] %v1299
    %1362 = vst [vmem:[#allocation11 + $0x8] sm:$0xff] %v1302
    %1363 = vst [vmem:[#allocation11 + $0x10] sm:$0xff] %v1307
    %1364 = vst [vmem:[#allocation11 + $0x18] sm:$0xff] %v1310
    %1365 = vst [vmem:[#allocation11 + $0x20] sm:$0xff] %v1315
    %1366 = vst [vmem:[#allocation11 + $0x28] sm:$0xff] %v1318
    %1367 = vst [vmem:[#allocation11 + $0x30] sm:$0xff] %v1323
    %1368 = vst [vmem:[#allocation11 + $0x38] sm:$0xff] %v1326
    %1369 = vst [vmem:[#allocation11 + $0x40] sm:$0xff] %v1331
    %1370 = vst [vmem:[#allocation11 + $0x48] sm:$0xff] %v1334
    %1371 = vst [vmem:[#allocation11 + $0x50] sm:$0xff] %v1339
    %1372 = vst [vmem:[#allocation11 + $0x58] sm:$0xff] %v1342
    %1373 = vst [vmem:[#allocation11 + $0x60] sm:$0xff] %v1347
    %1374 = vst [vmem:[#allocation11 + $0x68] sm:$0xff] %v1350
    %1375 = vst [vmem:[#allocation11 + $0x70] sm:$0xff] %v1355
    %1376 = vst [vmem:[#allocation11 + $0x78] sm:$0xff] %v1358
    // Predicated region
    $region34: #{sage_forward.1} parent=1 // pred_check
      _
    $region35: #{sage_forward.1} parent=1 // pred_check_branch
      %1378 = sbr.rel (0) target = $region37
    $region36: #{sage_forward.1} parent=1 // pred_region
      %s1380 = ssub.s32 2048, 2048
      %1381 = vsyncadd [#allocation5], %s1380
      %s1382 = sshll.u32 [#allocation11], 4
      %s1383 = int_to_ptr.vmem [resolvable:$true] %s1382
      %1388 = dma.vmem_to_hbm [thread:$0]  %s1383, 2048, %s4, [#allocation5], 128, 128, 8
    $region37: #{sage_forward.1} parent=1 // pred_fallthru
      _
    // Predicated region
    $region38: #{sage_forward.1} parent=1 // pred_check
      _
    $region39: #{sage_forward.1} parent=1 // pred_check_branch
      %1390 = sbr.rel (0) target = $region41
    $region40: #{sage_forward.1} parent=1 // pred_region
      %1391 = dma.done [#allocation5], 2048
    $region41: #{sage_forward.1} parent=1 // pred_fallthru
      _
    %1392 = vsyncpa [#allocation4], 1
    %1393 = vsyncpa [#allocation7], 1
    %1394 = vsyncpa [#allocation10], 1
    %1395 = vsyncpa [#allocation5], 1

</llo_original>
